<compile_context>
chip_gen: v5e
topology: v5e:2x2
jax: 0.10.0
libtpu: 0.0.40
codegen_flags: <defaults>
</compile_context>

<pallas_src>
import functools

import jax
import jax.numpy as jnp
import numpy as np
from jax.experimental import pallas as pl
from jax.experimental.pallas import tpu as pltpu


# ----------------------------------------------------------------------------------
# Fused Pallas kernel: all cb_num conv blocks in one invocation, everything in VMEM.
# ----------------------------------------------------------------------------------
def fused_encoder_kernel(n_layers, B, L0, C, use_bf16,
                         x_ref, w_ref, bn_ref, o_ref, xp, z_scr):
    """Refs:
        x_ref  : (B*L0, C)            channel-padded, channels-last, flattened rows
        w_ref  : (n_layers*3*C, C)    rows [(3l+k)*C : (3l+k+1)*C] = tap-k weight of layer l
        bn_ref : (2*n_layers, C)      rows 2l / 2l+1 = gamma / beta of layer l (zero-padded)
        o_ref  : (B*L_out, C)         pooled output of the last block (flat rows)
        xp     : (B*(L0+8)+8, C)      zero-halo padded activations, reused across layers
        z_scr  : (L0, C)              staging buffer for the stride-2 max-pool reads
    Scratch layout per layer (seg = L_cur + 8):
        rows [b*seg, b*seg+8)        zero gap (aligned (8,C) store; row b*seg+7 is the left halo,
                                      row (b+1)*seg is the right halo of batch b)
        rows [b*seg+8, b*seg+8+L_cur) activation rows of batch b (aligned, start multiple of 8)
    """
    f32 = jnp.float32
    zero_gap = jnp.zeros((8, C), f32)          # hoisted: built once, stored many times

    L_cur = L0
    for l in range(n_layers):                  # static unroll over conv blocks
        seg = L_cur + 8
        last = (l == n_layers - 1)

        # ---- (a) zero the B+1 halo gap blocks for this layer's geometry (aligned stores) ----
        for b in range(B + 1):
            xp[b * seg: b * seg + 8, :] = zero_gap

        # ---- (b) layer 0: stage the input rows into the padded scratch (aligned stores) ----
        if l == 0:
            for b in range(B):
                xp[b * seg + 8: b * seg + 8 + L_cur, :] = x_ref[b * L_cur:(b + 1) * L_cur, :]

        # ---- per-layer weights (static sublane slices at multiple-of-8 offsets) ----
        w0 = w_ref[(3 * l + 0) * C:(3 * l + 1) * C, :]
        w1 = w_ref[(3 * l + 1) * C:(3 * l + 2) * C, :]
        w2 = w_ref[(3 * l + 2) * C:(3 * l + 3) * C, :]
        if use_bf16:
            w0, w1, w2 = (w.astype(jnp.bfloat16) for w in (w0, w1, w2))

        # ---- (c) Conv1d(k=3, padding=1) as 3 accumulating MXU matmuls per batch; no lane concat,
        #          no boundary selects (per-batch zero halos). BN sums accumulated on the MXU. ----
        ones8 = jnp.ones((8, L_cur), f32)      # MXU row-sum helper (8 identical rows; M=8 aligned)
        s8 = jnp.zeros((8, C), f32)
        sq8 = jnp.zeros((8, C), f32)
        ys = []
        for b in range(B):
            base = b * seg + 8
            left = xp[base - 1: base - 1 + L_cur, :]     # x[t-1]  (left halo row is zero)
            mid = xp[base: base + L_cur, :]              # x[t]    (aligned load)
            right = xp[base + 1: base + 1 + L_cur, :]    # x[t+1]  (right halo row is zero)
            if use_bf16:
                left, mid, right = (t.astype(jnp.bfloat16) for t in (left, mid, right))
            y = (jnp.dot(left, w0, preferred_element_type=f32)
                 + jnp.dot(mid, w1, preferred_element_type=f32)
                 + jnp.dot(right, w2, preferred_element_type=f32))
            ys.append(y)
            s8 = s8 + jnp.dot(ones8, y, preferred_element_type=f32)
            sq8 = sq8 + jnp.dot(ones8, y * y, preferred_element_type=f32)

        # ---- (d) BatchNorm1d: batch stats over (N, L), biased var, eps=1e-5, folded affine ----
        inv_n = 1.0 / float(B * L_cur)
        mean = s8[0:1, :] * inv_n
        var = jnp.maximum(sq8[0:1, :] * inv_n - mean * mean, 0.0)
        gb = bn_ref[2 * l: 2 * l + 2, :]                 # (2, C): gamma, beta
        scale = gb[0:1, :] * jax.lax.rsqrt(var + 1e-5)
        shift = gb[1:2, :] - mean * scale

        # ---- (e) affine + ReLU + MaxPool1d(2); store into next layer's slots / output ----
        L_nxt = L_cur // 2
        seg_nxt = L_nxt + 8
        for b in range(B):
            z = jnp.maximum(ys[b] * scale + shift, 0.0)  # (L_cur, C)
            z_scr[0:L_cur, :] = z
            pooled = jnp.maximum(z_scr[pl.ds(0, L_nxt, stride=2), :],
                                 z_scr[pl.ds(1, L_nxt, stride=2), :])  # (L_nxt, C)
            if last:
                o_ref[b * L_nxt:(b + 1) * L_nxt, :] = pooled
            else:
                xp[b * seg_nxt + 8: b * seg_nxt + 8 + L_nxt, :] = pooled

        L_cur = L_nxt


def encoder_forward(x_ncl, params, *, use_bf16_matmul=False):
    """Full encoder_net forward.

    x_ncl  : (B, Cin, L) like PyTorch (L must be divisible by 2**len(params))
    params : list of (w (3, Cin_l, Cout_l), b (Cout_l,), g (Cout_l,), beta (Cout_l,))
    returns: (B, Cout, L // 2**len(params))
    """
    x = x_ncl.astype(jnp.float32)              # x.type(FloatTensor)
    B, c_in0, L = x.shape
    n_layers = len(params)
    assert L % (2 ** n_layers) == 0, "L must be divisible by 2**cb_num"
    L_out = L // (2 ** n_layers)
    c_out_final = params[-1][0].shape[-1]

    # Common padded channel width (lane dim), rounded up to a multiple of 8.
    C = max(max(w.shape[1], w.shape[2]) for (w, _, _, _) in params)
    C = -(-C // 8) * 8

    # Input: NCL -> channels-last, flattened to (B*L, C), zero-padded channels (no in-kernel reshape).
    x_flat = jnp.transpose(x, (0, 2, 1)).reshape(B * L, c_in0)
    x_flat = jnp.pad(x_flat, ((0, 0), (0, C - c_in0)))

    # Packed weight slab + packed BN slab (conv bias b intentionally dropped: cancelled by BN mean).
    # Padded channels carry gamma=beta=0 so they stay exactly zero through every block.
    w_rows, bn_rows = [], []
    for (w, b, g, beta) in params:
        _, ci, co = w.shape
        wp = jnp.zeros((3, C, C), jnp.float32).at[:, :ci, :co].set(w)
        w_rows.append(wp.reshape(3 * C, C))
        gp = jnp.zeros((C,), jnp.float32).at[:co].set(g)
        bp = jnp.zeros((C,), jnp.float32).at[:co].set(beta)
        bn_rows.append(jnp.stack([gp, bp], axis=0))
    w_packed = jnp.concatenate(w_rows, axis=0)             # (n_layers*3*C, C)
    bn_packed = jnp.concatenate(bn_rows, axis=0)           # (2*n_layers, C)

    vmem = pl.BlockSpec(memory_space=pltpu.MemorySpace.VMEM)
    out_flat = pl.pallas_call(
        functools.partial(fused_encoder_kernel, n_layers, B, L, C, bool(use_bf16_matmul)),
        out_shape=jax.ShapeDtypeStruct((B * L_out, C), jnp.float32),
        in_specs=[vmem, vmem, vmem],
        out_specs=vmem,
        scratch_shapes=[
            pltpu.VMEM((B * (L + 8) + 8, C), jnp.float32),  # per-batch zero-halo padded activations
            pltpu.VMEM((L, C), jnp.float32),                # max-pool staging buffer (largest layer)
        ],
        # Explicit VMEM guard (v7x has 64 MiB physical / 32 MiB default scoped). At production
        # sizes (B*L ~ 1e5 rows) this kernel must switch to a row-tiled grid with two-pass BN.
        compiler_params=pltpu.CompilerParams(vmem_limit_bytes=32 * 1024 * 1024),
    )(x_flat, w_packed, bn_packed)

    out = out_flat.reshape(B, L_out, C)[:, :, :c_out_final]
    return jnp.transpose(out, (0, 2, 1))


# ----------------------------------------------------------------------------------
# Pure-JAX reference (same semantics, including the conv bias) for a correctness check.
# ----------------------------------------------------------------------------------
def ref_block(x_blc, w, b, g, beta):
    B, L, Cin = x_blc.shape
    xp = jnp.pad(x_blc, ((0, 0), (1, 1), (0, 0)))
    y = jnp.zeros((B, L, w.shape[-1]), jnp.float32)
    for k in range(3):
        y = y + jnp.einsum("blc,co->blo", xp[:, k:k + L, :], w[k])
    y = y + b[None, None, :]
    mean = jnp.mean(y, axis=(0, 1), keepdims=True)
    var = jnp.mean((y - mean) ** 2, axis=(0, 1), keepdims=True)
    y = (y - mean) / jnp.sqrt(var + 1e-5)
    y = y * g[None, None, :] + beta[None, None, :]
    y = jnp.maximum(y, 0.0)
    return y.reshape(B, L // 2, 2, -1).max(axis=2)


def encoder_ref(x_ncl, params):
    h = jnp.transpose(x_ncl.astype(jnp.float32), (0, 2, 1))
    for (w, b, g, beta) in params:
        h = ref_block(h, w, b, g, beta)
    return jnp.transpose(h, (0, 2, 1))


# ----------------------------------------------------------------------------------
if __name__ == "__main__":
    B, in_chn, L = 2, 4, 64          # L must be divisible by 2**cb_num
    hidden_chn, cb_num = 32, 4

    key = jax.random.PRNGKey(0)
    k_x, k_p = jax.random.split(key)
    x_ncl = jax.random.normal(k_x, (B, in_chn, L), dtype=jnp.float32)

    # Deterministic synthetic parameters (shapes match nn.Conv1d / nn.BatchNorm1d).
    params = []
    c_in = in_chn
    for _ in range(cb_num):
        k_p, kw, kb = jax.random.split(k_p, 3)
        w = jax.random.normal(kw, (3, c_in, hidden_chn), dtype=jnp.float32) * 0.1
        b = jax.random.normal(kb, (hidden_chn,), dtype=jnp.float32) * 0.1  # used by ref, cancelled by BN
        g = jnp.ones((hidden_chn,), jnp.float32)       # BN weight init = 1
        beta = jnp.zeros((hidden_chn,), jnp.float32)   # BN bias init = 0
        params.append((w, b, g, beta))
        c_in = hidden_chn

    out = jax.block_until_ready(encoder_forward(x_ncl, params))
    assert out.shape == (B, hidden_chn, L // (2 ** cb_num)), out.shape

    ref = jax.block_until_ready(encoder_ref(x_ncl, params))
    np.testing.assert_allclose(np.asarray(out), np.asarray(ref), rtol=2e-2, atol=2e-2)

    print("KERNEL_OK")
</pallas_src>

<mosaic_0001>
module attributes {stable_mosaic.version = 11 : i64} {
  func.func @fused_encoder_kernel(%arg0: memref<128x32xf32, #tpu.memory_space<vmem>>, %arg1: memref<384x32xf32, #tpu.memory_space<vmem>>, %arg2: memref<8x32xf32, #tpu.memory_space<vmem>>, %arg3: memref<8x32xf32, #tpu.memory_space<vmem>>, %arg4: memref<152x32xf32, #tpu.memory_space<vmem>>, %arg5: memref<64x32xf32, #tpu.memory_space<vmem>>) attributes {dimension_semantics = [], scalar_prefetch = 0 : i64, scratch_operands = 2 : i64, tpu.core_type = #tpu.core_type<tc>} {
    %cst = arith.constant 0.000000e+00 : f32
    %0 = vector.broadcast %cst : f32 to vector<8x32xf32>
    %c0 = arith.constant 0 : index
    %c0_0 = arith.constant 0 : index
    %1 = vector.load %arg4[%c0, %c0_0] : memref<152x32xf32, #tpu.memory_space<vmem>>, vector<8x32xf32>
    tpu.vector_store %arg4[%c0, %c0_0], %0 {strides = array<i32>} : memref<152x32xf32, #tpu.memory_space<vmem>>, vector<8x32xf32>,
    %c72 = arith.constant 72 : index
    %c0_1 = arith.constant 0 : index
    %2 = vector.load %arg4[%c72, %c0_1] : memref<152x32xf32, #tpu.memory_space<vmem>>, vector<8x32xf32>
    tpu.vector_store %arg4[%c72, %c0_1], %0 {strides = array<i32>} : memref<152x32xf32, #tpu.memory_space<vmem>>, vector<8x32xf32>,
    %c144 = arith.constant 144 : index
    %c0_2 = arith.constant 0 : index
    %3 = vector.load %arg4[%c144, %c0_2] : memref<152x32xf32, #tpu.memory_space<vmem>>, vector<8x32xf32>
    tpu.vector_store %arg4[%c144, %c0_2], %0 {strides = array<i32>} : memref<152x32xf32, #tpu.memory_space<vmem>>, vector<8x32xf32>,
    %c0_3 = arith.constant 0 : index
    %c0_4 = arith.constant 0 : index
    %4 = vector.load %arg0[%c0_3, %c0_4] : memref<128x32xf32, #tpu.memory_space<vmem>>, vector<64x32xf32>
    %c8 = arith.constant 8 : index
    %c0_5 = arith.constant 0 : index
    %5 = vector.load %arg4[%c8, %c0_5] : memref<152x32xf32, #tpu.memory_space<vmem>>, vector<64x32xf32>
    tpu.vector_store %arg4[%c8, %c0_5], %4 {strides = array<i32>} : memref<152x32xf32, #tpu.memory_space<vmem>>, vector<64x32xf32>,
    %c64 = arith.constant 64 : index
    %c0_6 = arith.constant 0 : index
    %6 = vector.load %arg0[%c64, %c0_6] : memref<128x32xf32, #tpu.memory_space<vmem>>, vector<64x32xf32>
    %c80 = arith.constant 80 : index
    %c0_7 = arith.constant 0 : index
    %7 = vector.load %arg4[%c80, %c0_7] : memref<152x32xf32, #tpu.memory_space<vmem>>, vector<64x32xf32>
    tpu.vector_store %arg4[%c80, %c0_7], %6 {strides = array<i32>} : memref<152x32xf32, #tpu.memory_space<vmem>>, vector<64x32xf32>,
    %c0_8 = arith.constant 0 : index
    %c0_9 = arith.constant 0 : index
    %8 = vector.load %arg1[%c0_8, %c0_9] : memref<384x32xf32, #tpu.memory_space<vmem>>, vector<32x32xf32>
    %c32 = arith.constant 32 : index
    %c0_10 = arith.constant 0 : index
    %9 = vector.load %arg1[%c32, %c0_10] : memref<384x32xf32, #tpu.memory_space<vmem>>, vector<32x32xf32>
    %c64_11 = arith.constant 64 : index
    %c0_12 = arith.constant 0 : index
    %10 = vector.load %arg1[%c64_11, %c0_12] : memref<384x32xf32, #tpu.memory_space<vmem>>, vector<32x32xf32>
    %cst_13 = arith.constant 1.000000e+00 : f32
    %11 = vector.broadcast %cst_13 : f32 to vector<8x64xf32>
    %cst_14 = arith.constant 0.000000e+00 : f32
    %12 = vector.broadcast %cst_14 : f32 to vector<8x32xf32>
    %cst_15 = arith.constant 0.000000e+00 : f32
    %13 = vector.broadcast %cst_15 : f32 to vector<8x32xf32>
    %c7 = arith.constant 7 : index
    %c0_16 = arith.constant 0 : index
    %14 = vector.load %arg4[%c7, %c0_16] : memref<152x32xf32, #tpu.memory_space<vmem>>, vector<64x32xf32>
    %c8_17 = arith.constant 8 : index
    %c0_18 = arith.constant 0 : index
    %15 = vector.load %arg4[%c8_17, %c0_18] : memref<152x32xf32, #tpu.memory_space<vmem>>, vector<64x32xf32>
    %c9 = arith.constant 9 : index
    %c0_19 = arith.constant 0 : index
    %16 = vector.load %arg4[%c9, %c0_19] : memref<152x32xf32, #tpu.memory_space<vmem>>, vector<64x32xf32>
    %cst_20 = arith.constant dense<0.000000e+00> : vector<64x32xf32>
    %17 = tpu.matmul %14, %8, %cst_20 {dimension_numbers = #tpu.dot_dimension_numbers<[1], [0], [0], [1], [0, 0, 1, 1], [], []>} : vector<64x32xf32>, vector<32x32xf32>, vector<64x32xf32> -> vector<64x32xf32>
    %cst_21 = arith.constant dense<0.000000e+00> : vector<64x32xf32>
    %18 = tpu.matmul %15, %9, %cst_21 {dimension_numbers = #tpu.dot_dimension_numbers<[1], [0], [0], [1], [0, 0, 1, 1], [], []>} : vector<64x32xf32>, vector<32x32xf32>, vector<64x32xf32> -> vector<64x32xf32>
    %19 = arith.addf %17, %18 : vector<64x32xf32>
    %cst_22 = arith.constant dense<0.000000e+00> : vector<64x32xf32>
    %20 = tpu.matmul %16, %10, %cst_22 {dimension_numbers = #tpu.dot_dimension_numbers<[1], [0], [0], [1], [0, 0, 1, 1], [], []>} : vector<64x32xf32>, vector<32x32xf32>, vector<64x32xf32> -> vector<64x32xf32>
    %21 = arith.addf %19, %20 : vector<64x32xf32>
    %cst_23 = arith.constant dense<0.000000e+00> : vector<8x32xf32>
    %22 = tpu.matmul %11, %21, %cst_23 {dimension_numbers = #tpu.dot_dimension_numbers<[1], [0], [0], [1], [0, 0, 1, 1], [], []>} : vector<8x64xf32>, vector<64x32xf32>, vector<8x32xf32> -> vector<8x32xf32>
    %23 = arith.addf %12, %22 : vector<8x32xf32>
    %24 = arith.mulf %21, %21 : vector<64x32xf32>
    %cst_24 = arith.constant dense<0.000000e+00> : vector<8x32xf32>
    %25 = tpu.matmul %11, %24, %cst_24 {dimension_numbers = #tpu.dot_dimension_numbers<[1], [0], [0], [1], [0, 0, 1, 1], [], []>} : vector<8x64xf32>, vector<64x32xf32>, vector<8x32xf32> -> vector<8x32xf32>
    %26 = arith.addf %13, %25 : vector<8x32xf32>
    %c79 = arith.constant 79 : index
    %c0_25 = arith.constant 0 : index
    %27 = vector.load %arg4[%c79, %c0_25] : memref<152x32xf32, #tpu.memory_space<vmem>>, vector<64x32xf32>
    %c80_26 = arith.constant 80 : index
    %c0_27 = arith.constant 0 : index
    %28 = vector.load %arg4[%c80_26, %c0_27] : memref<152x32xf32, #tpu.memory_space<vmem>>, vector<64x32xf32>
    %c81 = arith.constant 81 : index
    %c0_28 = arith.constant 0 : index
    %29 = vector.load %arg4[%c81, %c0_28] : memref<152x32xf32, #tpu.memory_space<vmem>>, vector<64x32xf32>
    %cst_29 = arith.constant dense<0.000000e+00> : vector<64x32xf32>
    %30 = tpu.matmul %27, %8, %cst_29 {dimension_numbers = #tpu.dot_dimension_numbers<[1], [0], [0], [1], [0, 0, 1, 1], [], []>} : vector<64x32xf32>, vector<32x32xf32>, vector<64x32xf32> -> vector<64x32xf32>
    %cst_30 = arith.constant dense<0.000000e+00> : vector<64x32xf32>
    %31 = tpu.matmul %28, %9, %cst_30 {dimension_numbers = #tpu.dot_dimension_numbers<[1], [0], [0], [1], [0, 0, 1, 1], [], []>} : vector<64x32xf32>, vector<32x32xf32>, vector<64x32xf32> -> vector<64x32xf32>
    %32 = arith.addf %30, %31 : vector<64x32xf32>
    %cst_31 = arith.constant dense<0.000000e+00> : vector<64x32xf32>
    %33 = tpu.matmul %29, %10, %cst_31 {dimension_numbers = #tpu.dot_dimension_numbers<[1], [0], [0], [1], [0, 0, 1, 1], [], []>} : vector<64x32xf32>, vector<32x32xf32>, vector<64x32xf32> -> vector<64x32xf32>
    %34 = arith.addf %32, %33 : vector<64x32xf32>
    %cst_32 = arith.constant dense<0.000000e+00> : vector<8x32xf32>
    %35 = tpu.matmul %11, %34, %cst_32 {dimension_numbers = #tpu.dot_dimension_numbers<[1], [0], [0], [1], [0, 0, 1, 1], [], []>} : vector<8x64xf32>, vector<64x32xf32>, vector<8x32xf32> -> vector<8x32xf32>
    %36 = arith.addf %23, %35 : vector<8x32xf32>
    %37 = arith.mulf %34, %34 : vector<64x32xf32>
    %cst_33 = arith.constant dense<0.000000e+00> : vector<8x32xf32>
    %38 = tpu.matmul %11, %37, %cst_33 {dimension_numbers = #tpu.dot_dimension_numbers<[1], [0], [0], [1], [0, 0, 1, 1], [], []>} : vector<8x64xf32>, vector<64x32xf32>, vector<8x32xf32> -> vector<8x32xf32>
    %39 = arith.addf %26, %38 : vector<8x32xf32>
    %40 = vector.extract_strided_slice %36 {offsets = [0, 0], sizes = [1, 32], strides = [1, 1]} : vector<8x32xf32> to vector<1x32xf32>
    %cst_34 = arith.constant 7.812500e-03 : f32
    %41 = vector.broadcast %cst_34 : f32 to vector<1x32xf32>
    %42 = arith.mulf %40, %41 : vector<1x32xf32>
    %43 = vector.extract_strided_slice %39 {offsets = [0, 0], sizes = [1, 32], strides = [1, 1]} : vector<8x32xf32> to vector<1x32xf32>
    %cst_35 = arith.constant 7.812500e-03 : f32
    %44 = vector.broadcast %cst_35 : f32 to vector<1x32xf32>
    %45 = arith.mulf %43, %44 : vector<1x32xf32>
    %46 = arith.mulf %42, %42 : vector<1x32xf32>
    %47 = arith.subf %45, %46 : vector<1x32xf32>
    %cst_36 = arith.constant 0.000000e+00 : f32
    %48 = vector.broadcast %cst_36 : f32 to vector<1x32xf32>
    %49 = arith.maximumf %47, %48 : vector<1x32xf32>
    %c0_37 = arith.constant 0 : index
    %c0_38 = arith.constant 0 : index
    %50 = vector.load %arg2[%c0_37, %c0_38] : memref<8x32xf32, #tpu.memory_space<vmem>>, vector<2x32xf32>
    %51 = vector.extract_strided_slice %50 {offsets = [0, 0], sizes = [1, 32], strides = [1, 1]} : vector<2x32xf32> to vector<1x32xf32>
    %cst_39 = arith.constant 9.99999974E-6 : f32
    %52 = vector.broadcast %cst_39 : f32 to vector<1x32xf32>
    %53 = arith.addf %49, %52 : vector<1x32xf32>
    %54 = math.rsqrt %53 : vector<1x32xf32>
    %55 = arith.mulf %51, %54 : vector<1x32xf32>
    %56 = vector.extract_strided_slice %50 {offsets = [1, 0], sizes = [1, 32], strides = [1, 1]} : vector<2x32xf32> to vector<1x32xf32>
    %57 = arith.mulf %42, %55 : vector<1x32xf32>
    %58 = arith.subf %56, %57 : vector<1x32xf32>
    %59 = vector.broadcast %55 : vector<1x32xf32> to vector<64x32xf32>
    %60 = arith.mulf %21, %59 : vector<64x32xf32>
    %61 = vector.broadcast %58 : vector<1x32xf32> to vector<64x32xf32>
    %62 = arith.addf %60, %61 : vector<64x32xf32>
    %cst_40 = arith.constant 0.000000e+00 : f32
    %63 = vector.broadcast %cst_40 : f32 to vector<64x32xf32>
    %64 = arith.maximumf %62, %63 : vector<64x32xf32>
    %c0_41 = arith.constant 0 : index
    %c0_42 = arith.constant 0 : index
    %65 = vector.load %arg5[%c0_41, %c0_42] : memref<64x32xf32, #tpu.memory_space<vmem>>, vector<64x32xf32>
    tpu.vector_store %arg5[%c0_41, %c0_42], %64 {strides = array<i32>} : memref<64x32xf32, #tpu.memory_space<vmem>>, vector<64x32xf32>,
    %c0_43 = arith.constant 0 : index
    %c0_44 = arith.constant 0 : index
    %66 = tpu.strided_load %arg5[%c0_43, %c0_44] {strides = array<i32: 2, 1>} : memref<64x32xf32, #tpu.memory_space<vmem>>, vector<32x32xf32>
    %c1 = arith.constant 1 : index
    %c0_45 = arith.constant 0 : index
    %67 = tpu.strided_load %arg5[%c1, %c0_45] {strides = array<i32: 2, 1>} : memref<64x32xf32, #tpu.memory_space<vmem>>, vector<32x32xf32>
    %68 = arith.maximumf %66, %67 : vector<32x32xf32>
    %c8_46 = arith.constant 8 : index
    %c0_47 = arith.constant 0 : index
    %69 = vector.load %arg4[%c8_46, %c0_47] : memref<152x32xf32, #tpu.memory_space<vmem>>, vector<32x32xf32>
    tpu.vector_store %arg4[%c8_46, %c0_47], %68 {strides = array<i32>} : memref<152x32xf32, #tpu.memory_space<vmem>>, vector<32x32xf32>,
    %70 = vector.broadcast %55 : vector<1x32xf32> to vector<64x32xf32>
    %71 = arith.mulf %34, %70 : vector<64x32xf32>
    %72 = vector.broadcast %58 : vector<1x32xf32> to vector<64x32xf32>
    %73 = arith.addf %71, %72 : vector<64x32xf32>
    %cst_48 = arith.constant 0.000000e+00 : f32
    %74 = vector.broadcast %cst_48 : f32 to vector<64x32xf32>
    %75 = arith.maximumf %73, %74 : vector<64x32xf32>
    %c0_49 = arith.constant 0 : index
    %c0_50 = arith.constant 0 : index
    %76 = vector.load %arg5[%c0_49, %c0_50] : memref<64x32xf32, #tpu.memory_space<vmem>>, vector<64x32xf32>
    tpu.vector_store %arg5[%c0_49, %c0_50], %75 {strides = array<i32>} : memref<64x32xf32, #tpu.memory_space<vmem>>, vector<64x32xf32>,
    %c0_51 = arith.constant 0 : index
    %c0_52 = arith.constant 0 : index
    %77 = tpu.strided_load %arg5[%c0_51, %c0_52] {strides = array<i32: 2, 1>} : memref<64x32xf32, #tpu.memory_space<vmem>>, vector<32x32xf32>
    %c1_53 = arith.constant 1 : index
    %c0_54 = arith.constant 0 : index
    %78 = tpu.strided_load %arg5[%c1_53, %c0_54] {strides = array<i32: 2, 1>} : memref<64x32xf32, #tpu.memory_space<vmem>>, vector<32x32xf32>
    %79 = arith.maximumf %77, %78 : vector<32x32xf32>
    %c48 = arith.constant 48 : index
    %c0_55 = arith.constant 0 : index
    %80 = vector.load %arg4[%c48, %c0_55] : memref<152x32xf32, #tpu.memory_space<vmem>>, vector<32x32xf32>
    tpu.vector_store %arg4[%c48, %c0_55], %79 {strides = array<i32>} : memref<152x32xf32, #tpu.memory_space<vmem>>, vector<32x32xf32>,
    %c0_56 = arith.constant 0 : index
    %c0_57 = arith.constant 0 : index
    %81 = vector.load %arg4[%c0_56, %c0_57] : memref<152x32xf32, #tpu.memory_space<vmem>>, vector<8x32xf32>
    tpu.vector_store %arg4[%c0_56, %c0_57], %0 {strides = array<i32>} : memref<152x32xf32, #tpu.memory_space<vmem>>, vector<8x32xf32>,
    %c40 = arith.constant 40 : index
    %c0_58 = arith.constant 0 : index
    %82 = vector.load %arg4[%c40, %c0_58] : memref<152x32xf32, #tpu.memory_space<vmem>>, vector<8x32xf32>
    tpu.vector_store %arg4[%c40, %c0_58], %0 {strides = array<i32>} : memref<152x32xf32, #tpu.memory_space<vmem>>, vector<8x32xf32>,
    %c80_59 = arith.constant 80 : index
    %c0_60 = arith.constant 0 : index
    %83 = vector.load %arg4[%c80_59, %c0_60] : memref<152x32xf32, #tpu.memory_space<vmem>>, vector<8x32xf32>
    tpu.vector_store %arg4[%c80_59, %c0_60], %0 {strides = array<i32>} : memref<152x32xf32, #tpu.memory_space<vmem>>, vector<8x32xf32>,
    %c96 = arith.constant 96 : index
    %c0_61 = arith.constant 0 : index
    %84 = vector.load %arg1[%c96, %c0_61] : memref<384x32xf32, #tpu.memory_space<vmem>>, vector<32x32xf32>
    %c128 = arith.constant 128 : index
    %c0_62 = arith.constant 0 : index
    %85 = vector.load %arg1[%c128, %c0_62] : memref<384x32xf32, #tpu.memory_space<vmem>>, vector<32x32xf32>
    %c160 = arith.constant 160 : index
    %c0_63 = arith.constant 0 : index
    %86 = vector.load %arg1[%c160, %c0_63] : memref<384x32xf32, #tpu.memory_space<vmem>>, vector<32x32xf32>
    %cst_64 = arith.constant 1.000000e+00 : f32
    %87 = vector.broadcast %cst_64 : f32 to vector<8x32xf32>
    %cst_65 = arith.constant 0.000000e+00 : f32
    %88 = vector.broadcast %cst_65 : f32 to vector<8x32xf32>
    %cst_66 = arith.constant 0.000000e+00 : f32
    %89 = vector.broadcast %cst_66 : f32 to vector<8x32xf32>
    %c7_67 = arith.constant 7 : index
    %c0_68 = arith.constant 0 : index
    %90 = vector.load %arg4[%c7_67, %c0_68] : memref<152x32xf32, #tpu.memory_space<vmem>>, vector<32x32xf32>
    %c8_69 = arith.constant 8 : index
    %c0_70 = arith.constant 0 : index
    %91 = vector.load %arg4[%c8_69, %c0_70] : memref<152x32xf32, #tpu.memory_space<vmem>>, vector<32x32xf32>
    %c9_71 = arith.constant 9 : index
    %c0_72 = arith.constant 0 : index
    %92 = vector.load %arg4[%c9_71, %c0_72] : memref<152x32xf32, #tpu.memory_space<vmem>>, vector<32x32xf32>
    %cst_73 = arith.constant dense<0.000000e+00> : vector<32x32xf32>
    %93 = tpu.matmul %90, %84, %cst_73 {dimension_numbers = #tpu.dot_dimension_numbers<[1], [0], [0], [1], [0, 0, 1, 1], [], []>} : vector<32x32xf32>, vector<32x32xf32>, vector<32x32xf32> -> vector<32x32xf32>
    %cst_74 = arith.constant dense<0.000000e+00> : vector<32x32xf32>
    %94 = tpu.matmul %91, %85, %cst_74 {dimension_numbers = #tpu.dot_dimension_numbers<[1], [0], [0], [1], [0, 0, 1, 1], [], []>} : vector<32x32xf32>, vector<32x32xf32>, vector<32x32xf32> -> vector<32x32xf32>
    %95 = arith.addf %93, %94 : vector<32x32xf32>
    %cst_75 = arith.constant dense<0.000000e+00> : vector<32x32xf32>
    %96 = tpu.matmul %92, %86, %cst_75 {dimension_numbers = #tpu.dot_dimension_numbers<[1], [0], [0], [1], [0, 0, 1, 1], [], []>} : vector<32x32xf32>, vector<32x32xf32>, vector<32x32xf32> -> vector<32x32xf32>
    %97 = arith.addf %95, %96 : vector<32x32xf32>
    %cst_76 = arith.constant dense<0.000000e+00> : vector<8x32xf32>
    %98 = tpu.matmul %87, %97, %cst_76 {dimension_numbers = #tpu.dot_dimension_numbers<[1], [0], [0], [1], [0, 0, 1, 1], [], []>} : vector<8x32xf32>, vector<32x32xf32>, vector<8x32xf32> -> vector<8x32xf32>
    %99 = arith.addf %88, %98 : vector<8x32xf32>
    %100 = arith.mulf %97, %97 : vector<32x32xf32>
    %cst_77 = arith.constant dense<0.000000e+00> : vector<8x32xf32>
    %101 = tpu.matmul %87, %100, %cst_77 {dimension_numbers = #tpu.dot_dimension_numbers<[1], [0], [0], [1], [0, 0, 1, 1], [], []>} : vector<8x32xf32>, vector<32x32xf32>, vector<8x32xf32> -> vector<8x32xf32>
    %102 = arith.addf %89, %101 : vector<8x32xf32>
    %c47 = arith.constant 47 : index
    %c0_78 = arith.constant 0 : index
    %103 = vector.load %arg4[%c47, %c0_78] : memref<152x32xf32, #tpu.memory_space<vmem>>, vector<32x32xf32>
    %c48_79 = arith.constant 48 : index
    %c0_80 = arith.constant 0 : index
    %104 = vector.load %arg4[%c48_79, %c0_80] : memref<152x32xf32, #tpu.memory_space<vmem>>, vector<32x32xf32>
    %c49 = arith.constant 49 : index
    %c0_81 = arith.constant 0 : index
    %105 = vector.load %arg4[%c49, %c0_81] : memref<152x32xf32, #tpu.memory_space<vmem>>, vector<32x32xf32>
    %cst_82 = arith.constant dense<0.000000e+00> : vector<32x32xf32>
    %106 = tpu.matmul %103, %84, %cst_82 {dimension_numbers = #tpu.dot_dimension_numbers<[1], [0], [0], [1], [0, 0, 1, 1], [], []>} : vector<32x32xf32>, vector<32x32xf32>, vector<32x32xf32> -> vector<32x32xf32>
    %cst_83 = arith.constant dense<0.000000e+00> : vector<32x32xf32>
    %107 = tpu.matmul %104, %85, %cst_83 {dimension_numbers = #tpu.dot_dimension_numbers<[1], [0], [0], [1], [0, 0, 1, 1], [], []>} : vector<32x32xf32>, vector<32x32xf32>, vector<32x32xf32> -> vector<32x32xf32>
    %108 = arith.addf %106, %107 : vector<32x32xf32>
    %cst_84 = arith.constant dense<0.000000e+00> : vector<32x32xf32>
    %109 = tpu.matmul %105, %86, %cst_84 {dimension_numbers = #tpu.dot_dimension_numbers<[1], [0], [0], [1], [0, 0, 1, 1], [], []>} : vector<32x32xf32>, vector<32x32xf32>, vector<32x32xf32> -> vector<32x32xf32>
    %110 = arith.addf %108, %109 : vector<32x32xf32>
    %cst_85 = arith.constant dense<0.000000e+00> : vector<8x32xf32>
    %111 = tpu.matmul %87, %110, %cst_85 {dimension_numbers = #tpu.dot_dimension_numbers<[1], [0], [0], [1], [0, 0, 1, 1], [], []>} : vector<8x32xf32>, vector<32x32xf32>, vector<8x32xf32> -> vector<8x32xf32>
    %112 = arith.addf %99, %111 : vector<8x32xf32>
    %113 = arith.mulf %110, %110 : vector<32x32xf32>
    %cst_86 = arith.constant dense<0.000000e+00> : vector<8x32xf32>
    %114 = tpu.matmul %87, %113, %cst_86 {dimension_numbers = #tpu.dot_dimension_numbers<[1], [0], [0], [1], [0, 0, 1, 1], [], []>} : vector<8x32xf32>, vector<32x32xf32>, vector<8x32xf32> -> vector<8x32xf32>
    %115 = arith.addf %102, %114 : vector<8x32xf32>
    %116 = vector.extract_strided_slice %112 {offsets = [0, 0], sizes = [1, 32], strides = [1, 1]} : vector<8x32xf32> to vector<1x32xf32>
    %cst_87 = arith.constant 1.562500e-02 : f32
    %117 = vector.broadcast %cst_87 : f32 to vector<1x32xf32>
    %118 = arith.mulf %116, %117 : vector<1x32xf32>
    %119 = vector.extract_strided_slice %115 {offsets = [0, 0], sizes = [1, 32], strides = [1, 1]} : vector<8x32xf32> to vector<1x32xf32>
    %cst_88 = arith.constant 1.562500e-02 : f32
    %120 = vector.broadcast %cst_88 : f32 to vector<1x32xf32>
    %121 = arith.mulf %119, %120 : vector<1x32xf32>
    %122 = arith.mulf %118, %118 : vector<1x32xf32>
    %123 = arith.subf %121, %122 : vector<1x32xf32>
    %cst_89 = arith.constant 0.000000e+00 : f32
    %124 = vector.broadcast %cst_89 : f32 to vector<1x32xf32>
    %125 = arith.maximumf %123, %124 : vector<1x32xf32>
    %c2 = arith.constant 2 : index
    %c0_90 = arith.constant 0 : index
    %126 = vector.load %arg2[%c2, %c0_90] : memref<8x32xf32, #tpu.memory_space<vmem>>, vector<2x32xf32>
    %127 = vector.extract_strided_slice %126 {offsets = [0, 0], sizes = [1, 32], strides = [1, 1]} : vector<2x32xf32> to vector<1x32xf32>
    %cst_91 = arith.constant 9.99999974E-6 : f32
    %128 = vector.broadcast %cst_91 : f32 to vector<1x32xf32>
    %129 = arith.addf %125, %128 : vector<1x32xf32>
    %130 = math.rsqrt %129 : vector<1x32xf32>
    %131 = arith.mulf %127, %130 : vector<1x32xf32>
    %132 = vector.extract_strided_slice %126 {offsets = [1, 0], sizes = [1, 32], strides = [1, 1]} : vector<2x32xf32> to vector<1x32xf32>
    %133 = arith.mulf %118, %131 : vector<1x32xf32>
    %134 = arith.subf %132, %133 : vector<1x32xf32>
    %135 = vector.broadcast %131 : vector<1x32xf32> to vector<32x32xf32>
    %136 = arith.mulf %97, %135 : vector<32x32xf32>
    %137 = vector.broadcast %134 : vector<1x32xf32> to vector<32x32xf32>
    %138 = arith.addf %136, %137 : vector<32x32xf32>
    %cst_92 = arith.constant 0.000000e+00 : f32
    %139 = vector.broadcast %cst_92 : f32 to vector<32x32xf32>
    %140 = arith.maximumf %138, %139 : vector<32x32xf32>
    %c0_93 = arith.constant 0 : index
    %c0_94 = arith.constant 0 : index
    %141 = vector.load %arg5[%c0_93, %c0_94] : memref<64x32xf32, #tpu.memory_space<vmem>>, vector<32x32xf32>
    tpu.vector_store %arg5[%c0_93, %c0_94], %140 {strides = array<i32>} : memref<64x32xf32, #tpu.memory_space<vmem>>, vector<32x32xf32>,
    %c0_95 = arith.constant 0 : index
    %c0_96 = arith.constant 0 : index
    %142 = tpu.strided_load %arg5[%c0_95, %c0_96] {strides = array<i32: 2, 1>} : memref<64x32xf32, #tpu.memory_space<vmem>>, vector<16x32xf32>
    %c1_97 = arith.constant 1 : index
    %c0_98 = arith.constant 0 : index
    %143 = tpu.strided_load %arg5[%c1_97, %c0_98] {strides = array<i32: 2, 1>} : memref<64x32xf32, #tpu.memory_space<vmem>>, vector<16x32xf32>
    %144 = arith.maximumf %142, %143 : vector<16x32xf32>
    %c8_99 = arith.constant 8 : index
    %c0_100 = arith.constant 0 : index
    %145 = vector.load %arg4[%c8_99, %c0_100] : memref<152x32xf32, #tpu.memory_space<vmem>>, vector<16x32xf32>
    tpu.vector_store %arg4[%c8_99, %c0_100], %144 {strides = array<i32>} : memref<152x32xf32, #tpu.memory_space<vmem>>, vector<16x32xf32>,
    %146 = vector.broadcast %131 : vector<1x32xf32> to vector<32x32xf32>
    %147 = arith.mulf %110, %146 : vector<32x32xf32>
    %148 = vector.broadcast %134 : vector<1x32xf32> to vector<32x32xf32>
    %149 = arith.addf %147, %148 : vector<32x32xf32>
    %cst_101 = arith.constant 0.000000e+00 : f32
    %150 = vector.broadcast %cst_101 : f32 to vector<32x32xf32>
    %151 = arith.maximumf %149, %150 : vector<32x32xf32>
    %c0_102 = arith.constant 0 : index
    %c0_103 = arith.constant 0 : index
    %152 = vector.load %arg5[%c0_102, %c0_103] : memref<64x32xf32, #tpu.memory_space<vmem>>, vector<32x32xf32>
    tpu.vector_store %arg5[%c0_102, %c0_103], %151 {strides = array<i32>} : memref<64x32xf32, #tpu.memory_space<vmem>>, vector<32x32xf32>,
    %c0_104 = arith.constant 0 : index
    %c0_105 = arith.constant 0 : index
    %153 = tpu.strided_load %arg5[%c0_104, %c0_105] {strides = array<i32: 2, 1>} : memref<64x32xf32, #tpu.memory_space<vmem>>, vector<16x32xf32>
    %c1_106 = arith.constant 1 : index
    %c0_107 = arith.constant 0 : index
    %154 = tpu.strided_load %arg5[%c1_106, %c0_107] {strides = array<i32: 2, 1>} : memref<64x32xf32, #tpu.memory_space<vmem>>, vector<16x32xf32>
    %155 = arith.maximumf %153, %154 : vector<16x32xf32>
    %c32_108 = arith.constant 32 : index
    %c0_109 = arith.constant 0 : index
    %156 = vector.load %arg4[%c32_108, %c0_109] : memref<152x32xf32, #tpu.memory_space<vmem>>, vector<16x32xf32>
    tpu.vector_store %arg4[%c32_108, %c0_109], %155 {strides = array<i32>} : memref<152x32xf32, #tpu.memory_space<vmem>>, vector<16x32xf32>,
    %c0_110 = arith.constant 0 : index
    %c0_111 = arith.constant 0 : index
    %157 = vector.load %arg4[%c0_110, %c0_111] : memref<152x32xf32, #tpu.memory_space<vmem>>, vector<8x32xf32>
    tpu.vector_store %arg4[%c0_110, %c0_111], %0 {strides = array<i32>} : memref<152x32xf32, #tpu.memory_space<vmem>>, vector<8x32xf32>,
    %c24 = arith.constant 24 : index
    %c0_112 = arith.constant 0 : index
    %158 = vector.load %arg4[%c24, %c0_112] : memref<152x32xf32, #tpu.memory_space<vmem>>, vector<8x32xf32>
    tpu.vector_store %arg4[%c24, %c0_112], %0 {strides = array<i32>} : memref<152x32xf32, #tpu.memory_space<vmem>>, vector<8x32xf32>,
    %c48_113 = arith.constant 48 : index
    %c0_114 = arith.constant 0 : index
    %159 = vector.load %arg4[%c48_113, %c0_114] : memref<152x32xf32, #tpu.memory_space<vmem>>, vector<8x32xf32>
    tpu.vector_store %arg4[%c48_113, %c0_114], %0 {strides = array<i32>} : memref<152x32xf32, #tpu.memory_space<vmem>>, vector<8x32xf32>,
    %c192 = arith.constant 192 : index
    %c0_115 = arith.constant 0 : index
    %160 = vector.load %arg1[%c192, %c0_115] : memref<384x32xf32, #tpu.memory_space<vmem>>, vector<32x32xf32>
    %c224 = arith.constant 224 : index
    %c0_116 = arith.constant 0 : index
    %161 = vector.load %arg1[%c224, %c0_116] : memref<384x32xf32, #tpu.memory_space<vmem>>, vector<32x32xf32>
    %c256 = arith.constant 256 : index
    %c0_117 = arith.constant 0 : index
    %162 = vector.load %arg1[%c256, %c0_117] : memref<384x32xf32, #tpu.memory_space<vmem>>, vector<32x32xf32>
    %cst_118 = arith.constant 1.000000e+00 : f32
    %163 = vector.broadcast %cst_118 : f32 to vector<8x16xf32>
    %cst_119 = arith.constant 0.000000e+00 : f32
    %164 = vector.broadcast %cst_119 : f32 to vector<8x32xf32>
    %cst_120 = arith.constant 0.000000e+00 : f32
    %165 = vector.broadcast %cst_120 : f32 to vector<8x32xf32>
    %c7_121 = arith.constant 7 : index
    %c0_122 = arith.constant 0 : index
    %166 = vector.load %arg4[%c7_121, %c0_122] : memref<152x32xf32, #tpu.memory_space<vmem>>, vector<16x32xf32>
    %c8_123 = arith.constant 8 : index
    %c0_124 = arith.constant 0 : index
    %167 = vector.load %arg4[%c8_123, %c0_124] : memref<152x32xf32, #tpu.memory_space<vmem>>, vector<16x32xf32>
    %c9_125 = arith.constant 9 : index
    %c0_126 = arith.constant 0 : index
    %168 = vector.load %arg4[%c9_125, %c0_126] : memref<152x32xf32, #tpu.memory_space<vmem>>, vector<16x32xf32>
    %cst_127 = arith.constant dense<0.000000e+00> : vector<16x32xf32>
    %169 = tpu.matmul %166, %160, %cst_127 {dimension_numbers = #tpu.dot_dimension_numbers<[1], [0], [0], [1], [0, 0, 1, 1], [], []>} : vector<16x32xf32>, vector<32x32xf32>, vector<16x32xf32> -> vector<16x32xf32>
    %cst_128 = arith.constant dense<0.000000e+00> : vector<16x32xf32>
    %170 = tpu.matmul %167, %161, %cst_128 {dimension_numbers = #tpu.dot_dimension_numbers<[1], [0], [0], [1], [0, 0, 1, 1], [], []>} : vector<16x32xf32>, vector<32x32xf32>, vector<16x32xf32> -> vector<16x32xf32>
    %171 = arith.addf %169, %170 : vector<16x32xf32>
    %cst_129 = arith.constant dense<0.000000e+00> : vector<16x32xf32>
    %172 = tpu.matmul %168, %162, %cst_129 {dimension_numbers = #tpu.dot_dimension_numbers<[1], [0], [0], [1], [0, 0, 1, 1], [], []>} : vector<16x32xf32>, vector<32x32xf32>, vector<16x32xf32> -> vector<16x32xf32>
    %173 = arith.addf %171, %172 : vector<16x32xf32>
    %cst_130 = arith.constant dense<0.000000e+00> : vector<8x32xf32>
    %174 = tpu.matmul %163, %173, %cst_130 {dimension_numbers = #tpu.dot_dimension_numbers<[1], [0], [0], [1], [0, 0, 1, 1], [], []>} : vector<8x16xf32>, vector<16x32xf32>, vector<8x32xf32> -> vector<8x32xf32>
    %175 = arith.addf %164, %174 : vector<8x32xf32>
    %176 = arith.mulf %173, %173 : vector<16x32xf32>
    %cst_131 = arith.constant dense<0.000000e+00> : vector<8x32xf32>
    %177 = tpu.matmul %163, %176, %cst_131 {dimension_numbers = #tpu.dot_dimension_numbers<[1], [0], [0], [1], [0, 0, 1, 1], [], []>} : vector<8x16xf32>, vector<16x32xf32>, vector<8x32xf32> -> vector<8x32xf32>
    %178 = arith.addf %165, %177 : vector<8x32xf32>
    %c31 = arith.constant 31 : index
    %c0_132 = arith.constant 0 : index
    %179 = vector.load %arg4[%c31, %c0_132] : memref<152x32xf32, #tpu.memory_space<vmem>>, vector<16x32xf32>
    %c32_133 = arith.constant 32 : index
    %c0_134 = arith.constant 0 : index
    %180 = vector.load %arg4[%c32_133, %c0_134] : memref<152x32xf32, #tpu.memory_space<vmem>>, vector<16x32xf32>
    %c33 = arith.constant 33 : index
    %c0_135 = arith.constant 0 : index
    %181 = vector.load %arg4[%c33, %c0_135] : memref<152x32xf32, #tpu.memory_space<vmem>>, vector<16x32xf32>
    %cst_136 = arith.constant dense<0.000000e+00> : vector<16x32xf32>
    %182 = tpu.matmul %179, %160, %cst_136 {dimension_numbers = #tpu.dot_dimension_numbers<[1], [0], [0], [1], [0, 0, 1, 1], [], []>} : vector<16x32xf32>, vector<32x32xf32>, vector<16x32xf32> -> vector<16x32xf32>
    %cst_137 = arith.constant dense<0.000000e+00> : vector<16x32xf32>
    %183 = tpu.matmul %180, %161, %cst_137 {dimension_numbers = #tpu.dot_dimension_numbers<[1], [0], [0], [1], [0, 0, 1, 1], [], []>} : vector<16x32xf32>, vector<32x32xf32>, vector<16x32xf32> -> vector<16x32xf32>
    %184 = arith.addf %182, %183 : vector<16x32xf32>
    %cst_138 = arith.constant dense<0.000000e+00> : vector<16x32xf32>
    %185 = tpu.matmul %181, %162, %cst_138 {dimension_numbers = #tpu.dot_dimension_numbers<[1], [0], [0], [1], [0, 0, 1, 1], [], []>} : vector<16x32xf32>, vector<32x32xf32>, vector<16x32xf32> -> vector<16x32xf32>
    %186 = arith.addf %184, %185 : vector<16x32xf32>
    %cst_139 = arith.constant dense<0.000000e+00> : vector<8x32xf32>
    %187 = tpu.matmul %163, %186, %cst_139 {dimension_numbers = #tpu.dot_dimension_numbers<[1], [0], [0], [1], [0, 0, 1, 1], [], []>} : vector<8x16xf32>, vector<16x32xf32>, vector<8x32xf32> -> vector<8x32xf32>
    %188 = arith.addf %175, %187 : vector<8x32xf32>
    %189 = arith.mulf %186, %186 : vector<16x32xf32>
    %cst_140 = arith.constant dense<0.000000e+00> : vector<8x32xf32>
    %190 = tpu.matmul %163, %189, %cst_140 {dimension_numbers = #tpu.dot_dimension_numbers<[1], [0], [0], [1], [0, 0, 1, 1], [], []>} : vector<8x16xf32>, vector<16x32xf32>, vector<8x32xf32> -> vector<8x32xf32>
    %191 = arith.addf %178, %190 : vector<8x32xf32>
    %192 = vector.extract_strided_slice %188 {offsets = [0, 0], sizes = [1, 32], strides = [1, 1]} : vector<8x32xf32> to vector<1x32xf32>
    %cst_141 = arith.constant 3.125000e-02 : f32
    %193 = vector.broadcast %cst_141 : f32 to vector<1x32xf32>
    %194 = arith.mulf %192, %193 : vector<1x32xf32>
    %195 = vector.extract_strided_slice %191 {offsets = [0, 0], sizes = [1, 32], strides = [1, 1]} : vector<8x32xf32> to vector<1x32xf32>
    %cst_142 = arith.constant 3.125000e-02 : f32
    %196 = vector.broadcast %cst_142 : f32 to vector<1x32xf32>
    %197 = arith.mulf %195, %196 : vector<1x32xf32>
    %198 = arith.mulf %194, %194 : vector<1x32xf32>
    %199 = arith.subf %197, %198 : vector<1x32xf32>
    %cst_143 = arith.constant 0.000000e+00 : f32
    %200 = vector.broadcast %cst_143 : f32 to vector<1x32xf32>
    %201 = arith.maximumf %199, %200 : vector<1x32xf32>
    %c4 = arith.constant 4 : index
    %c0_144 = arith.constant 0 : index
    %202 = vector.load %arg2[%c4, %c0_144] : memref<8x32xf32, #tpu.memory_space<vmem>>, vector<2x32xf32>
    %203 = vector.extract_strided_slice %202 {offsets = [0, 0], sizes = [1, 32], strides = [1, 1]} : vector<2x32xf32> to vector<1x32xf32>
    %cst_145 = arith.constant 9.99999974E-6 : f32
    %204 = vector.broadcast %cst_145 : f32 to vector<1x32xf32>
    %205 = arith.addf %201, %204 : vector<1x32xf32>
    %206 = math.rsqrt %205 : vector<1x32xf32>
    %207 = arith.mulf %203, %206 : vector<1x32xf32>
    %208 = vector.extract_strided_slice %202 {offsets = [1, 0], sizes = [1, 32], strides = [1, 1]} : vector<2x32xf32> to vector<1x32xf32>
    %209 = arith.mulf %194, %207 : vector<1x32xf32>
    %210 = arith.subf %208, %209 : vector<1x32xf32>
    %211 = vector.broadcast %207 : vector<1x32xf32> to vector<16x32xf32>
    %212 = arith.mulf %173, %211 : vector<16x32xf32>
    %213 = vector.broadcast %210 : vector<1x32xf32> to vector<16x32xf32>
    %214 = arith.addf %212, %213 : vector<16x32xf32>
    %cst_146 = arith.constant 0.000000e+00 : f32
    %215 = vector.broadcast %cst_146 : f32 to vector<16x32xf32>
    %216 = arith.maximumf %214, %215 : vector<16x32xf32>
    %c0_147 = arith.constant 0 : index
    %c0_148 = arith.constant 0 : index
    %217 = vector.load %arg5[%c0_147, %c0_148] : memref<64x32xf32, #tpu.memory_space<vmem>>, vector<16x32xf32>
    tpu.vector_store %arg5[%c0_147, %c0_148], %216 {strides = array<i32>} : memref<64x32xf32, #tpu.memory_space<vmem>>, vector<16x32xf32>,
    %c0_149 = arith.constant 0 : index
    %c0_150 = arith.constant 0 : index
    %218 = tpu.strided_load %arg5[%c0_149, %c0_150] {strides = array<i32: 2, 1>} : memref<64x32xf32, #tpu.memory_space<vmem>>, vector<8x32xf32>
    %c1_151 = arith.constant 1 : index
    %c0_152 = arith.constant 0 : index
    %219 = tpu.strided_load %arg5[%c1_151, %c0_152] {strides = array<i32: 2, 1>} : memref<64x32xf32, #tpu.memory_space<vmem>>, vector<8x32xf32>
    %220 = arith.maximumf %218, %219 : vector<8x32xf32>
    %c8_153 = arith.constant 8 : index
    %c0_154 = arith.constant 0 : index
    %221 = vector.load %arg4[%c8_153, %c0_154] : memref<152x32xf32, #tpu.memory_space<vmem>>, vector<8x32xf32>
    tpu.vector_store %arg4[%c8_153, %c0_154], %220 {strides = array<i32>} : memref<152x32xf32, #tpu.memory_space<vmem>>, vector<8x32xf32>,
    %222 = vector.broadcast %207 : vector<1x32xf32> to vector<16x32xf32>
    %223 = arith.mulf %186, %222 : vector<16x32xf32>
    %224 = vector.broadcast %210 : vector<1x32xf32> to vector<16x32xf32>
    %225 = arith.addf %223, %224 : vector<16x32xf32>
    %cst_155 = arith.constant 0.000000e+00 : f32
    %226 = vector.broadcast %cst_155 : f32 to vector<16x32xf32>
    %227 = arith.maximumf %225, %226 : vector<16x32xf32>
    %c0_156 = arith.constant 0 : index
    %c0_157 = arith.constant 0 : index
    %228 = vector.load %arg5[%c0_156, %c0_157] : memref<64x32xf32, #tpu.memory_space<vmem>>, vector<16x32xf32>
    tpu.vector_store %arg5[%c0_156, %c0_157], %227 {strides = array<i32>} : memref<64x32xf32, #tpu.memory_space<vmem>>, vector<16x32xf32>,
    %c0_158 = arith.constant 0 : index
    %c0_159 = arith.constant 0 : index
    %229 = tpu.strided_load %arg5[%c0_158, %c0_159] {strides = array<i32: 2, 1>} : memref<64x32xf32, #tpu.memory_space<vmem>>, vector<8x32xf32>
    %c1_160 = arith.constant 1 : index
    %c0_161 = arith.constant 0 : index
    %230 = tpu.strided_load %arg5[%c1_160, %c0_161] {strides = array<i32: 2, 1>} : memref<64x32xf32, #tpu.memory_space<vmem>>, vector<8x32xf32>
    %231 = arith.maximumf %229, %230 : vector<8x32xf32>
    %c24_162 = arith.constant 24 : index
    %c0_163 = arith.constant 0 : index
    %232 = vector.load %arg4[%c24_162, %c0_163] : memref<152x32xf32, #tpu.memory_space<vmem>>, vector<8x32xf32>
    tpu.vector_store %arg4[%c24_162, %c0_163], %231 {strides = array<i32>} : memref<152x32xf32, #tpu.memory_space<vmem>>, vector<8x32xf32>,
    %c0_164 = arith.constant 0 : index
    %c0_165 = arith.constant 0 : index
    %233 = vector.load %arg4[%c0_164, %c0_165] : memref<152x32xf32, #tpu.memory_space<vmem>>, vector<8x32xf32>
    tpu.vector_store %arg4[%c0_164, %c0_165], %0 {strides = array<i32>} : memref<152x32xf32, #tpu.memory_space<vmem>>, vector<8x32xf32>,
    %c16 = arith.constant 16 : index
    %c0_166 = arith.constant 0 : index
    %234 = vector.load %arg4[%c16, %c0_166] : memref<152x32xf32, #tpu.memory_space<vmem>>, vector<8x32xf32>
    tpu.vector_store %arg4[%c16, %c0_166], %0 {strides = array<i32>} : memref<152x32xf32, #tpu.memory_space<vmem>>, vector<8x32xf32>,
    %c32_167 = arith.constant 32 : index
    %c0_168 = arith.constant 0 : index
    %235 = vector.load %arg4[%c32_167, %c0_168] : memref<152x32xf32, #tpu.memory_space<vmem>>, vector<8x32xf32>
    tpu.vector_store %arg4[%c32_167, %c0_168], %0 {strides = array<i32>} : memref<152x32xf32, #tpu.memory_space<vmem>>, vector<8x32xf32>,
    %c288 = arith.constant 288 : index
    %c0_169 = arith.constant 0 : index
    %236 = vector.load %arg1[%c288, %c0_169] : memref<384x32xf32, #tpu.memory_space<vmem>>, vector<32x32xf32>
    %c320 = arith.constant 320 : index
    %c0_170 = arith.constant 0 : index
    %237 = vector.load %arg1[%c320, %c0_170] : memref<384x32xf32, #tpu.memory_space<vmem>>, vector<32x32xf32>
    %c352 = arith.constant 352 : index
    %c0_171 = arith.constant 0 : index
    %238 = vector.load %arg1[%c352, %c0_171] : memref<384x32xf32, #tpu.memory_space<vmem>>, vector<32x32xf32>
    %cst_172 = arith.constant 1.000000e+00 : f32
    %239 = vector.broadcast %cst_172 : f32 to vector<8x8xf32>
    %cst_173 = arith.constant 0.000000e+00 : f32
    %240 = vector.broadcast %cst_173 : f32 to vector<8x32xf32>
    %cst_174 = arith.constant 0.000000e+00 : f32
    %241 = vector.broadcast %cst_174 : f32 to vector<8x32xf32>
    %c7_175 = arith.constant 7 : index
    %c0_176 = arith.constant 0 : index
    %242 = vector.load %arg4[%c7_175, %c0_176] : memref<152x32xf32, #tpu.memory_space<vmem>>, vector<8x32xf32>
    %c8_177 = arith.constant 8 : index
    %c0_178 = arith.constant 0 : index
    %243 = vector.load %arg4[%c8_177, %c0_178] : memref<152x32xf32, #tpu.memory_space<vmem>>, vector<8x32xf32>
    %c9_179 = arith.constant 9 : index
    %c0_180 = arith.constant 0 : index
    %244 = vector.load %arg4[%c9_179, %c0_180] : memref<152x32xf32, #tpu.memory_space<vmem>>, vector<8x32xf32>
    %cst_181 = arith.constant dense<0.000000e+00> : vector<8x32xf32>
    %245 = tpu.matmul %242, %236, %cst_181 {dimension_numbers = #tpu.dot_dimension_numbers<[1], [0], [0], [1], [0, 0, 1, 1], [], []>} : vector<8x32xf32>, vector<32x32xf32>, vector<8x32xf32> -> vector<8x32xf32>
    %cst_182 = arith.constant dense<0.000000e+00> : vector<8x32xf32>
    %246 = tpu.matmul %243, %237, %cst_182 {dimension_numbers = #tpu.dot_dimension_numbers<[1], [0], [0], [1], [0, 0, 1, 1], [], []>} : vector<8x32xf32>, vector<32x32xf32>, vector<8x32xf32> -> vector<8x32xf32>
    %247 = arith.addf %245, %246 : vector<8x32xf32>
    %cst_183 = arith.constant dense<0.000000e+00> : vector<8x32xf32>
    %248 = tpu.matmul %244, %238, %cst_183 {dimension_numbers = #tpu.dot_dimension_numbers<[1], [0], [0], [1], [0, 0, 1, 1], [], []>} : vector<8x32xf32>, vector<32x32xf32>, vector<8x32xf32> -> vector<8x32xf32>
    %249 = arith.addf %247, %248 : vector<8x32xf32>
    %cst_184 = arith.constant dense<0.000000e+00> : vector<8x32xf32>
    %250 = tpu.matmul %239, %249, %cst_184 {dimension_numbers = #tpu.dot_dimension_numbers<[1], [0], [0], [1], [0, 0, 1, 1], [], []>} : vector<8x8xf32>, vector<8x32xf32>, vector<8x32xf32> -> vector<8x32xf32>
    %251 = arith.addf %240, %250 : vector<8x32xf32>
    %252 = arith.mulf %249, %249 : vector<8x32xf32>
    %cst_185 = arith.constant dense<0.000000e+00> : vector<8x32xf32>
    %253 = tpu.matmul %239, %252, %cst_185 {dimension_numbers = #tpu.dot_dimension_numbers<[1], [0], [0], [1], [0, 0, 1, 1], [], []>} : vector<8x8xf32>, vector<8x32xf32>, vector<8x32xf32> -> vector<8x32xf32>
    %254 = arith.addf %241, %253 : vector<8x32xf32>
    %c23 = arith.constant 23 : index
    %c0_186 = arith.constant 0 : index
    %255 = vector.load %arg4[%c23, %c0_186] : memref<152x32xf32, #tpu.memory_space<vmem>>, vector<8x32xf32>
    %c24_187 = arith.constant 24 : index
    %c0_188 = arith.constant 0 : index
    %256 = vector.load %arg4[%c24_187, %c0_188] : memref<152x32xf32, #tpu.memory_space<vmem>>, vector<8x32xf32>
    %c25 = arith.constant 25 : index
    %c0_189 = arith.constant 0 : index
    %257 = vector.load %arg4[%c25, %c0_189] : memref<152x32xf32, #tpu.memory_space<vmem>>, vector<8x32xf32>
    %cst_190 = arith.constant dense<0.000000e+00> : vector<8x32xf32>
    %258 = tpu.matmul %255, %236, %cst_190 {dimension_numbers = #tpu.dot_dimension_numbers<[1], [0], [0], [1], [0, 0, 1, 1], [], []>} : vector<8x32xf32>, vector<32x32xf32>, vector<8x32xf32> -> vector<8x32xf32>
    %cst_191 = arith.constant dense<0.000000e+00> : vector<8x32xf32>
    %259 = tpu.matmul %256, %237, %cst_191 {dimension_numbers = #tpu.dot_dimension_numbers<[1], [0], [0], [1], [0, 0, 1, 1], [], []>} : vector<8x32xf32>, vector<32x32xf32>, vector<8x32xf32> -> vector<8x32xf32>
    %260 = arith.addf %258, %259 : vector<8x32xf32>
    %cst_192 = arith.constant dense<0.000000e+00> : vector<8x32xf32>
    %261 = tpu.matmul %257, %238, %cst_192 {dimension_numbers = #tpu.dot_dimension_numbers<[1], [0], [0], [1], [0, 0, 1, 1], [], []>} : vector<8x32xf32>, vector<32x32xf32>, vector<8x32xf32> -> vector<8x32xf32>
    %262 = arith.addf %260, %261 : vector<8x32xf32>
    %cst_193 = arith.constant dense<0.000000e+00> : vector<8x32xf32>
    %263 = tpu.matmul %239, %262, %cst_193 {dimension_numbers = #tpu.dot_dimension_numbers<[1], [0], [0], [1], [0, 0, 1, 1], [], []>} : vector<8x8xf32>, vector<8x32xf32>, vector<8x32xf32> -> vector<8x32xf32>
    %264 = arith.addf %251, %263 : vector<8x32xf32>
    %265 = arith.mulf %262, %262 : vector<8x32xf32>
    %cst_194 = arith.constant dense<0.000000e+00> : vector<8x32xf32>
    %266 = tpu.matmul %239, %265, %cst_194 {dimension_numbers = #tpu.dot_dimension_numbers<[1], [0], [0], [1], [0, 0, 1, 1], [], []>} : vector<8x8xf32>, vector<8x32xf32>, vector<8x32xf32> -> vector<8x32xf32>
    %267 = arith.addf %254, %266 : vector<8x32xf32>
    %268 = vector.extract_strided_slice %264 {offsets = [0, 0], sizes = [1, 32], strides = [1, 1]} : vector<8x32xf32> to vector<1x32xf32>
    %cst_195 = arith.constant 6.250000e-02 : f32
    %269 = vector.broadcast %cst_195 : f32 to vector<1x32xf32>
    %270 = arith.mulf %268, %269 : vector<1x32xf32>
    %271 = vector.extract_strided_slice %267 {offsets = [0, 0], sizes = [1, 32], strides = [1, 1]} : vector<8x32xf32> to vector<1x32xf32>
    %cst_196 = arith.constant 6.250000e-02 : f32
    %272 = vector.broadcast %cst_196 : f32 to vector<1x32xf32>
    %273 = arith.mulf %271, %272 : vector<1x32xf32>
    %274 = arith.mulf %270, %270 : vector<1x32xf32>
    %275 = arith.subf %273, %274 : vector<1x32xf32>
    %cst_197 = arith.constant 0.000000e+00 : f32
    %276 = vector.broadcast %cst_197 : f32 to vector<1x32xf32>
    %277 = arith.maximumf %275, %276 : vector<1x32xf32>
    %c6 = arith.constant 6 : index
    %c0_198 = arith.constant 0 : index
    %278 = vector.load %arg2[%c6, %c0_198] : memref<8x32xf32, #tpu.memory_space<vmem>>, vector<2x32xf32>
    %279 = vector.extract_strided_slice %278 {offsets = [0, 0], sizes = [1, 32], strides = [1, 1]} : vector<2x32xf32> to vector<1x32xf32>
    %cst_199 = arith.constant 9.99999974E-6 : f32
    %280 = vector.broadcast %cst_199 : f32 to vector<1x32xf32>
    %281 = arith.addf %277, %280 : vector<1x32xf32>
    %282 = math.rsqrt %281 : vector<1x32xf32>
    %283 = arith.mulf %279, %282 : vector<1x32xf32>
    %284 = vector.extract_strided_slice %278 {offsets = [1, 0], sizes = [1, 32], strides = [1, 1]} : vector<2x32xf32> to vector<1x32xf32>
    %285 = arith.mulf %270, %283 : vector<1x32xf32>
    %286 = arith.subf %284, %285 : vector<1x32xf32>
    %287 = vector.broadcast %283 : vector<1x32xf32> to vector<8x32xf32>
    %288 = arith.mulf %249, %287 : vector<8x32xf32>
    %289 = vector.broadcast %286 : vector<1x32xf32> to vector<8x32xf32>
    %290 = arith.addf %288, %289 : vector<8x32xf32>
    %cst_200 = arith.constant 0.000000e+00 : f32
    %291 = vector.broadcast %cst_200 : f32 to vector<8x32xf32>
    %292 = arith.maximumf %290, %291 : vector<8x32xf32>
    %c0_201 = arith.constant 0 : index
    %c0_202 = arith.constant 0 : index
    %293 = vector.load %arg5[%c0_201, %c0_202] : memref<64x32xf32, #tpu.memory_space<vmem>>, vector<8x32xf32>
    tpu.vector_store %arg5[%c0_201, %c0_202], %292 {strides = array<i32>} : memref<64x32xf32, #tpu.memory_space<vmem>>, vector<8x32xf32>,
    %c0_203 = arith.constant 0 : index
    %c0_204 = arith.constant 0 : index
    %294 = tpu.strided_load %arg5[%c0_203, %c0_204] {strides = array<i32: 2, 1>} : memref<64x32xf32, #tpu.memory_space<vmem>>, vector<4x32xf32>
    %c1_205 = arith.constant 1 : index
    %c0_206 = arith.constant 0 : index
    %295 = tpu.strided_load %arg5[%c1_205, %c0_206] {strides = array<i32: 2, 1>} : memref<64x32xf32, #tpu.memory_space<vmem>>, vector<4x32xf32>
    %296 = arith.maximumf %294, %295 : vector<4x32xf32>
    %c0_207 = arith.constant 0 : index
    %c0_208 = arith.constant 0 : index
    %297 = vector.load %arg3[%c0_207, %c0_208] : memref<8x32xf32, #tpu.memory_space<vmem>>, vector<4x32xf32>
    tpu.vector_store %arg3[%c0_207, %c0_208], %296 {strides = array<i32>} : memref<8x32xf32, #tpu.memory_space<vmem>>, vector<4x32xf32>,
    %298 = vector.broadcast %283 : vector<1x32xf32> to vector<8x32xf32>
    %299 = arith.mulf %262, %298 : vector<8x32xf32>
    %300 = vector.broadcast %286 : vector<1x32xf32> to vector<8x32xf32>
    %301 = arith.addf %299, %300 : vector<8x32xf32>
    %cst_209 = arith.constant 0.000000e+00 : f32
    %302 = vector.broadcast %cst_209 : f32 to vector<8x32xf32>
    %303 = arith.maximumf %301, %302 : vector<8x32xf32>
    %c0_210 = arith.constant 0 : index
    %c0_211 = arith.constant 0 : index
    %304 = vector.load %arg5[%c0_210, %c0_211] : memref<64x32xf32, #tpu.memory_space<vmem>>, vector<8x32xf32>
    tpu.vector_store %arg5[%c0_210, %c0_211], %303 {strides = array<i32>} : memref<64x32xf32, #tpu.memory_space<vmem>>, vector<8x32xf32>,
    %c0_212 = arith.constant 0 : index
    %c0_213 = arith.constant 0 : index
    %305 = tpu.strided_load %arg5[%c0_212, %c0_213] {strides = array<i32: 2, 1>} : memref<64x32xf32, #tpu.memory_space<vmem>>, vector<4x32xf32>
    %c1_214 = arith.constant 1 : index
    %c0_215 = arith.constant 0 : index
    %306 = tpu.strided_load %arg5[%c1_214, %c0_215] {strides = array<i32: 2, 1>} : memref<64x32xf32, #tpu.memory_space<vmem>>, vector<4x32xf32>
    %307 = arith.maximumf %305, %306 : vector<4x32xf32>
    %c4_216 = arith.constant 4 : index
    %c0_217 = arith.constant 0 : index
    %308 = vector.load %arg3[%c4_216, %c0_217] : memref<8x32xf32, #tpu.memory_space<vmem>>, vector<4x32xf32>
    tpu.vector_store %arg3[%c4_216, %c0_217], %307 {strides = array<i32>} : memref<8x32xf32, #tpu.memory_space<vmem>>, vector<4x32xf32>,
    return
  }
}

</mosaic_0001>

<llo_original>
// kernel: tpu_custom_call.1
$region0: #{tpu_custom_call.1}
  #allocation0 [shape = 'u32[]', space=smem, size = 0x4, offset = 0x4, fixed_abs, tag = 'smem constant byte address 0x4 - core index']
  #allocation1 [shape = 'u32[72,128]{1,0:T(1,128)}', space=vmem, size = 0x9000, scoped, tag = 'internal scratch']
  #allocation2 [shape = 'f32[152,32]{1,0:T(8,128)}', space=vmem, size = 0x13000, scoped, tag = 'scratch operand']
  #allocation3 [shape = 'f32[64,32]{1,0:T(8,128)}', space=vmem, size = 0x8000, scoped, tag = 'scratch operand']
  %s0 = inlined_call_operand.vmem [shape: f32[128,32], index: 0, kind: input, shape index: {}]
  %s1 = inlined_call_operand.vmem [shape: f32[384,32], index: 1, kind: input, shape index: {}]
  %s2 = inlined_call_operand.vmem [shape: f32[8,32], index: 2, kind: input, shape index: {}]
  %s3 = inlined_call_operand.hbm [shape: f32[8,32], index: 3, kind: output, shape index: {}]
  %s4 = sld [smem:[#allocation0]]
  $region22: #{tpu_custom_call.1} parent=0
    _
  %s6 = ssub.s32 1, %s4
  %s7 = scalar_select 0, %s6, %s4
  $region1: #{tpu_custom_call.1} parent=0
    #allocation4 [shape = 'u8[4096]{0}', space=vmem, size = 0x1000, scoped, tag = 'output window, operand 0, single buffered']
    #allocation5 [shape = 's32[1]{0}', space=sflag, size = 0x4, scoped, tag = 'scoped memory for tpu_custom_call.1']
    %8 = vsyncpa [#allocation5], 0
    // Predicated region
    $region2: #{tpu_custom_call.1} parent=1 // pred_check
      _
    $region3: #{tpu_custom_call.1} parent=1 // pred_check_branch
      %10 = sbr.rel (0) target = $region5
    $region4: #{tpu_custom_call.1} parent=1 // pred_region
      _
    $region5: #{tpu_custom_call.1} parent=1 // pred_fallthru
      _
    // Predicated region
    $region6: #{tpu_custom_call.1} parent=1 // pred_check
      _
    $region7: #{tpu_custom_call.1} parent=1 // pred_check_branch
      %12 = sbr.rel (0) target = $region9
    $region8: #{tpu_custom_call.1} parent=1 // pred_region
      _
    $region9: #{tpu_custom_call.1} parent=1 // pred_fallthru
      _
    // Predicated region
    $region10: #{tpu_custom_call.1} parent=1 // pred_check
      _
    $region11: #{tpu_custom_call.1} parent=1 // pred_check_branch
      %14 = sbr.rel (0) target = $region13
    $region12: #{tpu_custom_call.1} parent=1 // pred_region
      _
    $region13: #{tpu_custom_call.1} parent=1 // pred_fallthru
      _
    %vm15 = vcmask 261120
    %16 = vst.msk [vmem:[#allocation2] sm:$0xff] %vm15, 0.0
    %17 = vst.msk [vmem:[#allocation2 + $0x48] sm:$0xff] %vm15, 0.0
    %18 = vst.msk [vmem:[#allocation2 + $0x90] sm:$0xff] %vm15, 0.0
    %v19 = vld [vmem:[%s0] sm:$0xff]
    %v20 = vld [vmem:[%s0 + $0x8] sm:$0xff]
    %v21 = vld [vmem:[%s0 + $0x10] sm:$0xff]
    %v22 = vld [vmem:[%s0 + $0x18] sm:$0xff]
    %v23 = vld [vmem:[%s0 + $0x20] sm:$0xff]
    %v24 = vld [vmem:[%s0 + $0x28] sm:$0xff]
    %v25 = vld [vmem:[%s0 + $0x30] sm:$0xff]
    %v26 = vld [vmem:[%s0 + $0x38] sm:$0xff]
    %27 = vst.msk [vmem:[#allocation2 + $0x8] sm:$0xff] %vm15, %v19
    %28 = vst.msk [vmem:[#allocation2 + $0x10] sm:$0xff] %vm15, %v20
    %29 = vst.msk [vmem:[#allocation2 + $0x18] sm:$0xff] %vm15, %v21
    %30 = vst.msk [vmem:[#allocation2 + $0x20] sm:$0xff] %vm15, %v22
    %31 = vst.msk [vmem:[#allocation2 + $0x28] sm:$0xff] %vm15, %v23
    %32 = vst.msk [vmem:[#allocation2 + $0x30] sm:$0xff] %vm15, %v24
    %33 = vst.msk [vmem:[#allocation2 + $0x38] sm:$0xff] %vm15, %v25
    %34 = vst.msk [vmem:[#allocation2 + $0x40] sm:$0xff] %vm15, %v26
    %v35 = vld [vmem:[%s0 + $0x40] sm:$0xff]
    %v36 = vld [vmem:[%s0 + $0x48] sm:$0xff]
    %v37 = vld [vmem:[%s0 + $0x50] sm:$0xff]
    %v38 = vld [vmem:[%s0 + $0x58] sm:$0xff]
    %v39 = vld [vmem:[%s0 + $0x60] sm:$0xff]
    %v40 = vld [vmem:[%s0 + $0x68] sm:$0xff]
    %v41 = vld [vmem:[%s0 + $0x70] sm:$0xff]
    %v42 = vld [vmem:[%s0 + $0x78] sm:$0xff]
    %43 = vst.msk [vmem:[#allocation2 + $0x50] sm:$0xff] %vm15, %v35
    %44 = vst.msk [vmem:[#allocation2 + $0x58] sm:$0xff] %vm15, %v36
    %45 = vst.msk [vmem:[#allocation2 + $0x60] sm:$0xff] %vm15, %v37
    %46 = vst.msk [vmem:[#allocation2 + $0x68] sm:$0xff] %vm15, %v38
    %47 = vst.msk [vmem:[#allocation2 + $0x70] sm:$0xff] %vm15, %v39
    %48 = vst.msk [vmem:[#allocation2 + $0x78] sm:$0xff] %vm15, %v40
    %49 = vst.msk [vmem:[#allocation2 + $0x80] sm:$0xff] %vm15, %v41
    %50 = vst.msk [vmem:[#allocation2 + $0x88] sm:$0xff] %vm15, %v42
    %v51 = vld [vmem:[%s1] sm:$0xff]
    %v52 = vld [vmem:[%s1 + $0x8] sm:$0xff]
    %v53 = vld [vmem:[%s1 + $0x10] sm:$0xff]
    %v54 = vld [vmem:[%s1 + $0x18] sm:$0xff]
    %v55 = vld [vmem:[%s1 + $0x20] sm:$0xff]
    %v56 = vld [vmem:[%s1 + $0x28] sm:$0xff]
    %v57 = vld [vmem:[%s1 + $0x30] sm:$0xff]
    %v58 = vld [vmem:[%s1 + $0x38] sm:$0xff]
    %v59 = vld [vmem:[%s1 + $0x40] sm:$0xff]
    %v60 = vld [vmem:[%s1 + $0x48] sm:$0xff]
    %v61 = vld [vmem:[%s1 + $0x50] sm:$0xff]
    %v62 = vld [vmem:[%s1 + $0x58] sm:$0xff]
    %v63 = vld [vmem:[#allocation2 + $0x7] sm:$0xff]
    %v64 = vld [vmem:[#allocation2 + $0xf] sm:$0xff]
    %v65 = vld [vmem:[#allocation2 + $0x17] sm:$0xff]
    %v66 = vld [vmem:[#allocation2 + $0x1f] sm:$0xff]
    %v67 = vld [vmem:[#allocation2 + $0x27] sm:$0xff]
    %v68 = vld [vmem:[#allocation2 + $0x2f] sm:$0xff]
    %v69 = vld [vmem:[#allocation2 + $0x37] sm:$0xff]
    %v70 = vld [vmem:[#allocation2 + $0x3f] sm:$0xff]
    %v71 = vld [vmem:[#allocation2 + $0x8] sm:$0xff]
    %v72 = vld [vmem:[#allocation2 + $0x10] sm:$0xff]
    %v73 = vld [vmem:[#allocation2 + $0x18] sm:$0xff]
    %v74 = vld [vmem:[#allocation2 + $0x20] sm:$0xff]
    %v75 = vld [vmem:[#allocation2 + $0x28] sm:$0xff]
    %v76 = vld [vmem:[#allocation2 + $0x30] sm:$0xff]
    %v77 = vld [vmem:[#allocation2 + $0x38] sm:$0xff]
    %v78 = vld [vmem:[#allocation2 + $0x40] sm:$0xff]
    %v79 = vld [vmem:[#allocation2 + $0x9] sm:$0xff]
    %v80 = vld [vmem:[#allocation2 + $0x11] sm:$0xff]
    %v81 = vld [vmem:[#allocation2 + $0x19] sm:$0xff]
    %v82 = vld [vmem:[#allocation2 + $0x21] sm:$0xff]
    %v83 = vld [vmem:[#allocation2 + $0x29] sm:$0xff]
    %v84 = vld [vmem:[#allocation2 + $0x31] sm:$0xff]
    %v85 = vld [vmem:[#allocation2 + $0x39] sm:$0xff]
    %v86 = vld [vmem:[#allocation2 + $0x41] sm:$0xff]
    %v88 = vsel %vm15, %v71, 0
    %v91 = vsel %vm15, %v72, 0
    %v94 = vsel %vm15, %v73, 0
    %v97 = vsel %vm15, %v74, 0
    %v100 = vsel %vm15, %v75, 0
    %v103 = vsel %vm15, %v76, 0
    %v106 = vsel %vm15, %v77, 0
    %v109 = vsel %vm15, %v78, 0
    %111 = vmatpush.msra.mxu0 0.0
    %112 = vmatpush.msra.mxu0 0.0
    %113 = vmatpush.msra.mxu0 0.0
    %114 = vmatpush.msra.mxu0 0.0
    %115 = vmatpush.msra.mxu0 0.0
    %116 = vmatpush.msra.mxu0 0.0
    %117 = vmatpush.msra.mxu0 0.0
    %118 = vmatpush.msra.mxu0 0.0
    %119 = vmatpush.msra.mxu0 0.0
    %120 = vmatpush.msra.mxu0 0.0
    %121 = vmatpush.msra.mxu0 0.0
    %122 = vmatpush.msra.mxu0 0.0
    %123 = vmatpush.msra.mxu0 %v58
    %124 = vmatpush.msra.mxu0 %v57
    %125 = vmatpush.msra.mxu0 %v56
    %126 = vmatpush.msra.mxu0 %v55
    %127 = vmatmul.f32.gmra.mxu0 %v88
    %v128 = vpop.f32.mrf.mxu0
    %v129 = vadd.f32 0.0, %v128
    %130 = vmatmul.f32.gmra.mxu0 %v91
    %v131 = vpop.f32.mrf.mxu0
    %v132 = vadd.f32 0.0, %v131
    %133 = vmatmul.f32.gmra.mxu0 %v94
    %v134 = vpop.f32.mrf.mxu0
    %v135 = vadd.f32 0.0, %v134
    %136 = vmatmul.f32.gmra.mxu0 %v97
    %v137 = vpop.f32.mrf.mxu0
    %v138 = vadd.f32 0.0, %v137
    %139 = vmatmul.f32.gmra.mxu0 %v100
    %v140 = vpop.f32.mrf.mxu0
    %v141 = vadd.f32 0.0, %v140
    %142 = vmatmul.f32.gmra.mxu0 %v103
    %v143 = vpop.f32.mrf.mxu0
    %v144 = vadd.f32 0.0, %v143
    %145 = vmatmul.f32.gmra.mxu0 %v106
    %v146 = vpop.f32.mrf.mxu0
    %v147 = vadd.f32 0.0, %v146
    %148 = vmatmul.f32.gmra.mxu0 %v109
    %v149 = vpop.f32.mrf.mxu0
    %v150 = vadd.f32 0.0, %v149
    %151 = vdwg.mxu0
    %v153 = vsel %vm15, %v63, 0
    %v156 = vsel %vm15, %v64, 0
    %v159 = vsel %vm15, %v65, 0
    %v162 = vsel %vm15, %v66, 0
    %v165 = vsel %vm15, %v67, 0
    %v168 = vsel %vm15, %v68, 0
    %v171 = vsel %vm15, %v69, 0
    %v174 = vsel %vm15, %v70, 0
    %176 = vmatpush.msra.mxu0 0.0
    %177 = vmatpush.msra.mxu0 0.0
    %178 = vmatpush.msra.mxu0 0.0
    %179 = vmatpush.msra.mxu0 0.0
    %180 = vmatpush.msra.mxu0 0.0
    %181 = vmatpush.msra.mxu0 0.0
    %182 = vmatpush.msra.mxu0 0.0
    %183 = vmatpush.msra.mxu0 0.0
    %184 = vmatpush.msra.mxu0 0.0
    %185 = vmatpush.msra.mxu0 0.0
    %186 = vmatpush.msra.mxu0 0.0
    %187 = vmatpush.msra.mxu0 0.0
    %188 = vmatpush.msra.mxu0 %v54
    %189 = vmatpush.msra.mxu0 %v53
    %190 = vmatpush.msra.mxu0 %v52
    %191 = vmatpush.msra.mxu0 %v51
    %192 = vmatmul.f32.gmra.mxu0 %v153
    %v193 = vpop.f32.mrf.mxu0
    %v194 = vadd.f32 %v129, %v193
    %195 = vmatmul.f32.gmra.mxu0 %v156
    %v196 = vpop.f32.mrf.mxu0
    %v197 = vadd.f32 %v132, %v196
    %198 = vmatmul.f32.gmra.mxu0 %v159
    %v199 = vpop.f32.mrf.mxu0
    %v200 = vadd.f32 %v135, %v199
    %201 = vmatmul.f32.gmra.mxu0 %v162
    %v202 = vpop.f32.mrf.mxu0
    %v203 = vadd.f32 %v138, %v202
    %204 = vmatmul.f32.gmra.mxu0 %v165
    %v205 = vpop.f32.mrf.mxu0
    %v206 = vadd.f32 %v141, %v205
    %207 = vmatmul.f32.gmra.mxu0 %v168
    %v208 = vpop.f32.mrf.mxu0
    %v209 = vadd.f32 %v144, %v208
    %210 = vmatmul.f32.gmra.mxu0 %v171
    %v211 = vpop.f32.mrf.mxu0
    %v212 = vadd.f32 %v147, %v211
    %213 = vmatmul.f32.gmra.mxu0 %v174
    %v214 = vpop.f32.mrf.mxu0
    %v215 = vadd.f32 %v150, %v214
    %216 = vdwg.mxu0
    %v218 = vsel %vm15, %v79, 0
    %v221 = vsel %vm15, %v80, 0
    %v224 = vsel %vm15, %v81, 0
    %v227 = vsel %vm15, %v82, 0
    %v230 = vsel %vm15, %v83, 0
    %v233 = vsel %vm15, %v84, 0
    %v236 = vsel %vm15, %v85, 0
    %v239 = vsel %vm15, %v86, 0
    %241 = vmatpush.msra.mxu0 0.0
    %242 = vmatpush.msra.mxu0 0.0
    %243 = vmatpush.msra.mxu0 0.0
    %244 = vmatpush.msra.mxu0 0.0
    %245 = vmatpush.msra.mxu0 0.0
    %246 = vmatpush.msra.mxu0 0.0
    %247 = vmatpush.msra.mxu0 0.0
    %248 = vmatpush.msra.mxu0 0.0
    %249 = vmatpush.msra.mxu0 0.0
    %250 = vmatpush.msra.mxu0 0.0
    %251 = vmatpush.msra.mxu0 0.0
    %252 = vmatpush.msra.mxu0 0.0
    %253 = vmatpush.msra.mxu0 %v62
    %254 = vmatpush.msra.mxu0 %v61
    %255 = vmatpush.msra.mxu0 %v60
    %256 = vmatpush.msra.mxu0 %v59
    %257 = vmatmul.f32.gmra.mxu0 %v218
    %v258 = vpop.f32.mrf.mxu0
    %v259 = vadd.f32 0.0, %v258
    %260 = vmatmul.f32.gmra.mxu0 %v221
    %v261 = vpop.f32.mrf.mxu0
    %v262 = vadd.f32 0.0, %v261
    %263 = vmatmul.f32.gmra.mxu0 %v224
    %v264 = vpop.f32.mrf.mxu0
    %v265 = vadd.f32 0.0, %v264
    %266 = vmatmul.f32.gmra.mxu0 %v227
    %v267 = vpop.f32.mrf.mxu0
    %v268 = vadd.f32 0.0, %v267
    %269 = vmatmul.f32.gmra.mxu0 %v230
    %v270 = vpop.f32.mrf.mxu0
    %v271 = vadd.f32 0.0, %v270
    %272 = vmatmul.f32.gmra.mxu0 %v233
    %v273 = vpop.f32.mrf.mxu0
    %v274 = vadd.f32 0.0, %v273
    %275 = vmatmul.f32.gmra.mxu0 %v236
    %v276 = vpop.f32.mrf.mxu0
    %v277 = vadd.f32 0.0, %v276
    %278 = vmatmul.f32.gmra.mxu0 %v239
    %v279 = vpop.f32.mrf.mxu0
    %v280 = vadd.f32 0.0, %v279
    %281 = vdwg.mxu0
    %v282 = vadd.f32 %v194, %v259
    %v283 = vadd.f32 %v197, %v262
    %v284 = vadd.f32 %v200, %v265
    %v285 = vadd.f32 %v203, %v268
    %v286 = vadd.f32 %v206, %v271
    %v287 = vadd.f32 %v209, %v274
    %v288 = vadd.f32 %v212, %v277
    %v289 = vadd.f32 %v215, %v280
    %v290 = vmul.f32 %v282, %v282
    %v291 = vmul.f32 %v283, %v283
    %v292 = vmul.f32 %v284, %v284
    %v293 = vmul.f32 %v285, %v285
    %v294 = vmul.f32 %v286, %v286
    %v295 = vmul.f32 %v287, %v287
    %v296 = vmul.f32 %v288, %v288
    %v297 = vmul.f32 %v289, %v289
    %v298 = vld [vmem:[#allocation2 + $0x4f] sm:$0xff]
    %v299 = vld [vmem:[#allocation2 + $0x57] sm:$0xff]
    %v300 = vld [vmem:[#allocation2 + $0x5f] sm:$0xff]
    %v301 = vld [vmem:[#allocation2 + $0x67] sm:$0xff]
    %v302 = vld [vmem:[#allocation2 + $0x6f] sm:$0xff]
    %v303 = vld [vmem:[#allocation2 + $0x77] sm:$0xff]
    %v304 = vld [vmem:[#allocation2 + $0x7f] sm:$0xff]
    %v305 = vld [vmem:[#allocation2 + $0x87] sm:$0xff]
    %v306 = vld [vmem:[#allocation2 + $0x50] sm:$0xff]
    %v307 = vld [vmem:[#allocation2 + $0x58] sm:$0xff]
    %v308 = vld [vmem:[#allocation2 + $0x60] sm:$0xff]
    %v309 = vld [vmem:[#allocation2 + $0x68] sm:$0xff]
    %v310 = vld [vmem:[#allocation2 + $0x70] sm:$0xff]
    %v311 = vld [vmem:[#allocation2 + $0x78] sm:$0xff]
    %v312 = vld [vmem:[#allocation2 + $0x80] sm:$0xff]
    %v313 = vld [vmem:[#allocation2 + $0x88] sm:$0xff]
    %v314 = vld [vmem:[#allocation2 + $0x51] sm:$0xff]
    %v315 = vld [vmem:[#allocation2 + $0x59] sm:$0xff]
    %v316 = vld [vmem:[#allocation2 + $0x61] sm:$0xff]
    %v317 = vld [vmem:[#allocation2 + $0x69] sm:$0xff]
    %v318 = vld [vmem:[#allocation2 + $0x71] sm:$0xff]
    %v319 = vld [vmem:[#allocation2 + $0x79] sm:$0xff]
    %v320 = vld [vmem:[#allocation2 + $0x81] sm:$0xff]
    %v321 = vld [vmem:[#allocation2 + $0x89] sm:$0xff]
    %v323 = vsel %vm15, %v306, 0
    %v326 = vsel %vm15, %v307, 0
    %v329 = vsel %vm15, %v308, 0
    %v332 = vsel %vm15, %v309, 0
    %v335 = vsel %vm15, %v310, 0
    %v338 = vsel %vm15, %v311, 0
    %v341 = vsel %vm15, %v312, 0
    %v344 = vsel %vm15, %v313, 0
    %346 = vmatpush.msra.mxu0 0.0
    %347 = vmatpush.msra.mxu0 0.0
    %348 = vmatpush.msra.mxu0 0.0
    %349 = vmatpush.msra.mxu0 0.0
    %350 = vmatpush.msra.mxu0 0.0
    %351 = vmatpush.msra.mxu0 0.0
    %352 = vmatpush.msra.mxu0 0.0
    %353 = vmatpush.msra.mxu0 0.0
    %354 = vmatpush.msra.mxu0 0.0
    %355 = vmatpush.msra.mxu0 0.0
    %356 = vmatpush.msra.mxu0 0.0
    %357 = vmatpush.msra.mxu0 0.0
    %358 = vmatpush.msra.mxu0 %v58
    %359 = vmatpush.msra.mxu0 %v57
    %360 = vmatpush.msra.mxu0 %v56
    %361 = vmatpush.msra.mxu0 %v55
    %362 = vmatmul.f32.gmra.mxu0 %v323
    %v363 = vpop.f32.mrf.mxu0
    %v364 = vadd.f32 0.0, %v363
    %365 = vmatmul.f32.gmra.mxu0 %v326
    %v366 = vpop.f32.mrf.mxu0
    %v367 = vadd.f32 0.0, %v366
    %368 = vmatmul.f32.gmra.mxu0 %v329
    %v369 = vpop.f32.mrf.mxu0
    %v370 = vadd.f32 0.0, %v369
    %371 = vmatmul.f32.gmra.mxu0 %v332
    %v372 = vpop.f32.mrf.mxu0
    %v373 = vadd.f32 0.0, %v372
    %374 = vmatmul.f32.gmra.mxu0 %v335
    %v375 = vpop.f32.mrf.mxu0
    %v376 = vadd.f32 0.0, %v375
    %377 = vmatmul.f32.gmra.mxu0 %v338
    %v378 = vpop.f32.mrf.mxu0
    %v379 = vadd.f32 0.0, %v378
    %380 = vmatmul.f32.gmra.mxu0 %v341
    %v381 = vpop.f32.mrf.mxu0
    %v382 = vadd.f32 0.0, %v381
    %383 = vmatmul.f32.gmra.mxu0 %v344
    %v384 = vpop.f32.mrf.mxu0
    %v385 = vadd.f32 0.0, %v384
    %386 = vdwg.mxu0
    %v388 = vsel %vm15, %v298, 0
    %v391 = vsel %vm15, %v299, 0
    %v394 = vsel %vm15, %v300, 0
    %v397 = vsel %vm15, %v301, 0
    %v400 = vsel %vm15, %v302, 0
    %v403 = vsel %vm15, %v303, 0
    %v406 = vsel %vm15, %v304, 0
    %v409 = vsel %vm15, %v305, 0
    %411 = vmatpush.msra.mxu0 0.0
    %412 = vmatpush.msra.mxu0 0.0
    %413 = vmatpush.msra.mxu0 0.0
    %414 = vmatpush.msra.mxu0 0.0
    %415 = vmatpush.msra.mxu0 0.0
    %416 = vmatpush.msra.mxu0 0.0
    %417 = vmatpush.msra.mxu0 0.0
    %418 = vmatpush.msra.mxu0 0.0
    %419 = vmatpush.msra.mxu0 0.0
    %420 = vmatpush.msra.mxu0 0.0
    %421 = vmatpush.msra.mxu0 0.0
    %422 = vmatpush.msra.mxu0 0.0
    %423 = vmatpush.msra.mxu0 %v54
    %424 = vmatpush.msra.mxu0 %v53
    %425 = vmatpush.msra.mxu0 %v52
    %426 = vmatpush.msra.mxu0 %v51
    %427 = vmatmul.f32.gmra.mxu0 %v388
    %v428 = vpop.f32.mrf.mxu0
    %v429 = vadd.f32 %v364, %v428
    %430 = vmatmul.f32.gmra.mxu0 %v391
    %v431 = vpop.f32.mrf.mxu0
    %v432 = vadd.f32 %v367, %v431
    %433 = vmatmul.f32.gmra.mxu0 %v394
    %v434 = vpop.f32.mrf.mxu0
    %v435 = vadd.f32 %v370, %v434
    %436 = vmatmul.f32.gmra.mxu0 %v397
    %v437 = vpop.f32.mrf.mxu0
    %v438 = vadd.f32 %v373, %v437
    %439 = vmatmul.f32.gmra.mxu0 %v400
    %v440 = vpop.f32.mrf.mxu0
    %v441 = vadd.f32 %v376, %v440
    %442 = vmatmul.f32.gmra.mxu0 %v403
    %v443 = vpop.f32.mrf.mxu0
    %v444 = vadd.f32 %v379, %v443
    %445 = vmatmul.f32.gmra.mxu0 %v406
    %v446 = vpop.f32.mrf.mxu0
    %v447 = vadd.f32 %v382, %v446
    %448 = vmatmul.f32.gmra.mxu0 %v409
    %v449 = vpop.f32.mrf.mxu0
    %v450 = vadd.f32 %v385, %v449
    %451 = vdwg.mxu0
    %v453 = vsel %vm15, %v314, 0
    %v456 = vsel %vm15, %v315, 0
    %v459 = vsel %vm15, %v316, 0
    %v462 = vsel %vm15, %v317, 0
    %v465 = vsel %vm15, %v318, 0
    %v468 = vsel %vm15, %v319, 0
    %v471 = vsel %vm15, %v320, 0
    %v474 = vsel %vm15, %v321, 0
    %476 = vmatpush.msra.mxu0 0.0
    %477 = vmatpush.msra.mxu0 0.0
    %478 = vmatpush.msra.mxu0 0.0
    %479 = vmatpush.msra.mxu0 0.0
    %480 = vmatpush.msra.mxu0 0.0
    %481 = vmatpush.msra.mxu0 0.0
    %482 = vmatpush.msra.mxu0 0.0
    %483 = vmatpush.msra.mxu0 0.0
    %484 = vmatpush.msra.mxu0 0.0
    %485 = vmatpush.msra.mxu0 0.0
    %486 = vmatpush.msra.mxu0 0.0
    %487 = vmatpush.msra.mxu0 0.0
    %488 = vmatpush.msra.mxu0 %v62
    %489 = vmatpush.msra.mxu0 %v61
    %490 = vmatpush.msra.mxu0 %v60
    %491 = vmatpush.msra.mxu0 %v59
    %492 = vmatmul.f32.gmra.mxu0 %v453
    %v493 = vpop.f32.mrf.mxu0
    %v494 = vadd.f32 0.0, %v493
    %495 = vmatmul.f32.gmra.mxu0 %v456
    %v496 = vpop.f32.mrf.mxu0
    %v497 = vadd.f32 0.0, %v496
    %498 = vmatmul.f32.gmra.mxu0 %v459
    %v499 = vpop.f32.mrf.mxu0
    %v500 = vadd.f32 0.0, %v499
    %501 = vmatmul.f32.gmra.mxu0 %v462
    %v502 = vpop.f32.mrf.mxu0
    %v503 = vadd.f32 0.0, %v502
    %504 = vmatmul.f32.gmra.mxu0 %v465
    %v505 = vpop.f32.mrf.mxu0
    %v506 = vadd.f32 0.0, %v505
    %507 = vmatmul.f32.gmra.mxu0 %v468
    %v508 = vpop.f32.mrf.mxu0
    %v509 = vadd.f32 0.0, %v508
    %510 = vmatmul.f32.gmra.mxu0 %v471
    %v511 = vpop.f32.mrf.mxu0
    %v512 = vadd.f32 0.0, %v511
    %513 = vmatmul.f32.gmra.mxu0 %v474
    %v514 = vpop.f32.mrf.mxu0
    %v515 = vadd.f32 0.0, %v514
    %516 = vdwg.mxu0
    %v517 = vadd.f32 %v429, %v494
    %v518 = vadd.f32 %v432, %v497
    %v519 = vadd.f32 %v435, %v500
    %v520 = vadd.f32 %v438, %v503
    %v521 = vadd.f32 %v441, %v506
    %v522 = vadd.f32 %v444, %v509
    %v523 = vadd.f32 %v447, %v512
    %v524 = vadd.f32 %v450, %v515
    %vm525 = vcmask 523264
    %v527 = vsel %vm525, 1.0, 0
    %529 = vmatpush.msra.mxu0 0.0
    %530 = vmatpush.msra.mxu0 0.0
    %531 = vmatpush.msra.mxu0 0.0
    %532 = vmatpush.msra.mxu0 0.0
    %533 = vmatpush.msra.mxu0 0.0
    %534 = vmatpush.msra.mxu0 0.0
    %535 = vmatpush.msra.mxu0 0.0
    %536 = vmatpush.msra.mxu0 0.0
    %537 = vmatpush.msra.mxu0 %v524
    %538 = vmatpush.msra.mxu0 %v523
    %539 = vmatpush.msra.mxu0 %v522
    %540 = vmatpush.msra.mxu0 %v521
    %541 = vmatpush.msra.mxu0 %v520
    %542 = vmatpush.msra.mxu0 %v519
    %543 = vmatpush.msra.mxu0 %v518
    %544 = vmatpush.msra.mxu0 %v517
    %545 = vmatmul.f32.gmra.mxu0 %v527
    %v546 = vpop.f32.mrf.mxu0
    %v547 = vadd.f32 0.0, %v546
    %548 = vdwg.mxu0
    %549 = vmatpush.msra.mxu0 0.0
    %550 = vmatpush.msra.mxu0 0.0
    %551 = vmatpush.msra.mxu0 0.0
    %552 = vmatpush.msra.mxu0 0.0
    %553 = vmatpush.msra.mxu0 0.0
    %554 = vmatpush.msra.mxu0 0.0
    %555 = vmatpush.msra.mxu0 0.0
    %556 = vmatpush.msra.mxu0 0.0
    %557 = vmatpush.msra.mxu0 %v289
    %558 = vmatpush.msra.mxu0 %v288
    %559 = vmatpush.msra.mxu0 %v287
    %560 = vmatpush.msra.mxu0 %v286
    %561 = vmatpush.msra.mxu0 %v285
    %562 = vmatpush.msra.mxu0 %v284
    %563 = vmatpush.msra.mxu0 %v283
    %564 = vmatpush.msra.mxu0 %v282
    %565 = vmatmul.f32.gmra.mxu0 %v527
    %v566 = vpop.f32.mrf.mxu0
    %v567 = vadd.f32 %v547, %v566
    %568 = vdwg.mxu0
    %v569 = vmul.f32 %v517, %v517
    %v570 = vmul.f32 %v518, %v518
    %v571 = vmul.f32 %v519, %v519
    %v572 = vmul.f32 %v520, %v520
    %v573 = vmul.f32 %v521, %v521
    %v574 = vmul.f32 %v522, %v522
    %v575 = vmul.f32 %v523, %v523
    %v576 = vmul.f32 %v524, %v524
    %577 = vmatpush.msra.mxu0 0.0
    %578 = vmatpush.msra.mxu0 0.0
    %579 = vmatpush.msra.mxu0 0.0
    %580 = vmatpush.msra.mxu0 0.0
    %581 = vmatpush.msra.mxu0 0.0
    %582 = vmatpush.msra.mxu0 0.0
    %583 = vmatpush.msra.mxu0 0.0
    %584 = vmatpush.msra.mxu0 0.0
    %585 = vmatpush.msra.mxu0 %v576
    %586 = vmatpush.msra.mxu0 %v575
    %587 = vmatpush.msra.mxu0 %v574
    %588 = vmatpush.msra.mxu0 %v573
    %589 = vmatpush.msra.mxu0 %v572
    %590 = vmatpush.msra.mxu0 %v571
    %591 = vmatpush.msra.mxu0 %v570
    %592 = vmatpush.msra.mxu0 %v569
    %593 = vmatmul.f32.gmra.mxu0 %v527
    %v594 = vpop.f32.mrf.mxu0
    %v595 = vadd.f32 0.0, %v594
    %596 = vdwg.mxu0
    %597 = vmatpush.msra.mxu0 0.0
    %598 = vmatpush.msra.mxu0 0.0
    %599 = vmatpush.msra.mxu0 0.0
    %600 = vmatpush.msra.mxu0 0.0
    %601 = vmatpush.msra.mxu0 0.0
    %602 = vmatpush.msra.mxu0 0.0
    %603 = vmatpush.msra.mxu0 0.0
    %604 = vmatpush.msra.mxu0 0.0
    %605 = vmatpush.msra.mxu0 %v297
    %606 = vmatpush.msra.mxu0 %v296
    %607 = vmatpush.msra.mxu0 %v295
    %608 = vmatpush.msra.mxu0 %v294
    %609 = vmatpush.msra.mxu0 %v293
    %610 = vmatpush.msra.mxu0 %v292
    %611 = vmatpush.msra.mxu0 %v291
    %612 = vmatpush.msra.mxu0 %v290
    %613 = vmatmul.f32.gmra.mxu0 %v527
    %v614 = vpop.f32.mrf.mxu0
    %v615 = vadd.f32 %v595, %v614
    %616 = vdwg.mxu0
    %v617 = vmul.f32 %v567, 0.0078125
    %v618 = vmul.f32 %v615, 0.0078125
    %v619 = vmul.f32 %v617, %v617
    %v620 = vsub.f32 %v618, %v619
    %v621 = vmax.f32 %v620, 0.0
    %v622 = vld [vmem:[%s2] sm:$0x3]
    %v623 = vadd.f32 %v621, 1e-05
    %v624 = vrsqrt.pop %v623
    %v625 = vmul.f32 %v624, %v623
    %v626 = vmul.f32 %v625, %v624
    %v627 = vmul.f32 0.5, %v626
    %v628 = vsub.f32 1.5, %v627
    %v629 = vmul.f32 %v624, %v628
    %vm630 = vweird.f32 %v623
    %vm631 = vweird.f32 %v624
    %vm632 = vmor %vm630, %vm631
    %v633 = vsel %vm632, %v624, %v629
    %v634 = vmul.f32 %v622, %v633
    %v635 = vmul.f32 %v617, %v634
    %v637 = vrot.slane %v635, 7
    %v639 = vsub.f32 %v622, %v637
    %v640 = vperm.slane %v634, 0
    %v641 = vmul.f32 %v282, %v640
    %v642 = vmul.f32 %v283, %v640
    %v643 = vmul.f32 %v284, %v640
    %v644 = vmul.f32 %v285, %v640
    %v645 = vmul.f32 %v286, %v640
    %v646 = vmul.f32 %v287, %v640
    %v647 = vmul.f32 %v288, %v640
    %v648 = vmul.f32 %v289, %v640
    %v649 = vperm.slane %v639, 1
    %v650 = vadd.f32 %v641, %v649
    %v651 = vadd.f32 %v642, %v649
    %v652 = vadd.f32 %v643, %v649
    %v653 = vadd.f32 %v644, %v649
    %v654 = vadd.f32 %v645, %v649
    %v655 = vadd.f32 %v646, %v649
    %v656 = vadd.f32 %v647, %v649
    %v657 = vadd.f32 %v648, %v649
    %v658 = vmax.f32 %v650, 0.0
    %v659 = vmax.f32 %v651, 0.0
    %v660 = vmax.f32 %v652, 0.0
    %v661 = vmax.f32 %v653, 0.0
    %v662 = vmax.f32 %v654, 0.0
    %v663 = vmax.f32 %v655, 0.0
    %v664 = vmax.f32 %v656, 0.0
    %v665 = vmax.f32 %v657, 0.0
    %666 = vst.msk [vmem:[#allocation3] sm:$0xff] %vm15, %v658
    %667 = vst.msk [vmem:[#allocation3 + $0x8] sm:$0xff] %vm15, %v659
    %668 = vst.msk [vmem:[#allocation3 + $0x10] sm:$0xff] %vm15, %v660
    %669 = vst.msk [vmem:[#allocation3 + $0x18] sm:$0xff] %vm15, %v661
    %670 = vst.msk [vmem:[#allocation3 + $0x20] sm:$0xff] %vm15, %v662
    %671 = vst.msk [vmem:[#allocation3 + $0x28] sm:$0xff] %vm15, %v663
    %672 = vst.msk [vmem:[#allocation3 + $0x30] sm:$0xff] %vm15, %v664
    %673 = vst.msk [vmem:[#allocation3 + $0x38] sm:$0xff] %vm15, %v665
    %v674 = vld [vmem:[#allocation3] ss:$2 sm:$0xff]
    %s675 = scalar_lea.vmem [#allocation3], 16
    %v676 = vld [vmem:[%s675] ss:$2 sm:$0xff]
    %s677 = scalar_lea.vmem [#allocation3], 32
    %v678 = vld [vmem:[%s677] ss:$2 sm:$0xff]
    %s679 = scalar_lea.vmem [#allocation3], 48
    %v680 = vld [vmem:[%s679] ss:$2 sm:$0xff]
    %s681 = scalar_lea.vmem [#allocation3], 1
    %v682 = vld [vmem:[%s681] ss:$2 sm:$0xff]
    %s683 = scalar_lea.vmem [#allocation3], 17
    %v684 = vld [vmem:[%s683] ss:$2 sm:$0xff]
    %s685 = scalar_lea.vmem [#allocation3], 33
    %v686 = vld [vmem:[%s685] ss:$2 sm:$0xff]
    %s687 = scalar_lea.vmem [#allocation3], 49
    %v688 = vld [vmem:[%s687] ss:$2 sm:$0xff]
    %v689 = vmax.f32 %v674, %v682
    %v690 = vmax.f32 %v676, %v684
    %v691 = vmax.f32 %v678, %v686
    %v692 = vmax.f32 %v680, %v688
    %693 = vst.msk [vmem:[#allocation2 + $0x8] sm:$0xff] %vm15, %v689
    %694 = vst.msk [vmem:[#allocation2 + $0x10] sm:$0xff] %vm15, %v690
    %695 = vst.msk [vmem:[#allocation2 + $0x18] sm:$0xff] %vm15, %v691
    %696 = vst.msk [vmem:[#allocation2 + $0x20] sm:$0xff] %vm15, %v692
    %v697 = vmul.f32 %v517, %v640
    %v698 = vmul.f32 %v518, %v640
    %v699 = vmul.f32 %v519, %v640
    %v700 = vmul.f32 %v520, %v640
    %v701 = vmul.f32 %v521, %v640
    %v702 = vmul.f32 %v522, %v640
    %v703 = vmul.f32 %v523, %v640
    %v704 = vmul.f32 %v524, %v640
    %v705 = vadd.f32 %v697, %v649
    %v706 = vadd.f32 %v698, %v649
    %v707 = vadd.f32 %v699, %v649
    %v708 = vadd.f32 %v700, %v649
    %v709 = vadd.f32 %v701, %v649
    %v710 = vadd.f32 %v702, %v649
    %v711 = vadd.f32 %v703, %v649
    %v712 = vadd.f32 %v704, %v649
    %v713 = vmax.f32 %v705, 0.0
    %v714 = vmax.f32 %v706, 0.0
    %v715 = vmax.f32 %v707, 0.0
    %v716 = vmax.f32 %v708, 0.0
    %v717 = vmax.f32 %v709, 0.0
    %v718 = vmax.f32 %v710, 0.0
    %v719 = vmax.f32 %v711, 0.0
    %v720 = vmax.f32 %v712, 0.0
    %721 = vst.msk [vmem:[#allocation3] sm:$0xff] %vm15, %v713
    %722 = vst.msk [vmem:[#allocation3 + $0x8] sm:$0xff] %vm15, %v714
    %723 = vst.msk [vmem:[#allocation3 + $0x10] sm:$0xff] %vm15, %v715
    %724 = vst.msk [vmem:[#allocation3 + $0x18] sm:$0xff] %vm15, %v716
    %725 = vst.msk [vmem:[#allocation3 + $0x20] sm:$0xff] %vm15, %v717
    %726 = vst.msk [vmem:[#allocation3 + $0x28] sm:$0xff] %vm15, %v718
    %727 = vst.msk [vmem:[#allocation3 + $0x30] sm:$0xff] %vm15, %v719
    %728 = vst.msk [vmem:[#allocation3 + $0x38] sm:$0xff] %vm15, %v720
    %v729 = vld [vmem:[#allocation3] ss:$2 sm:$0xff]
    %v730 = vld [vmem:[%s675] ss:$2 sm:$0xff]
    %v731 = vld [vmem:[%s677] ss:$2 sm:$0xff]
    %v732 = vld [vmem:[%s679] ss:$2 sm:$0xff]
    %v733 = vld [vmem:[%s681] ss:$2 sm:$0xff]
    %v734 = vld [vmem:[%s683] ss:$2 sm:$0xff]
    %v735 = vld [vmem:[%s685] ss:$2 sm:$0xff]
    %v736 = vld [vmem:[%s687] ss:$2 sm:$0xff]
    %v737 = vmax.f32 %v729, %v733
    %v738 = vmax.f32 %v730, %v734
    %v739 = vmax.f32 %v731, %v735
    %v740 = vmax.f32 %v732, %v736
    %741 = vst.msk [vmem:[#allocation2 + $0x30] sm:$0xff] %vm15, %v737
    %742 = vst.msk [vmem:[#allocation2 + $0x38] sm:$0xff] %vm15, %v738
    %743 = vst.msk [vmem:[#allocation2 + $0x40] sm:$0xff] %vm15, %v739
    %744 = vst.msk [vmem:[#allocation2 + $0x48] sm:$0xff] %vm15, %v740
    %745 = vst.msk [vmem:[#allocation2] sm:$0xff] %vm15, 0.0
    %746 = vst.msk [vmem:[#allocation2 + $0x28] sm:$0xff] %vm15, 0.0
    %747 = vst.msk [vmem:[#allocation2 + $0x50] sm:$0xff] %vm15, 0.0
    %v748 = vld [vmem:[%s1 + $0x60] sm:$0xff]
    %v749 = vld [vmem:[%s1 + $0x68] sm:$0xff]
    %v750 = vld [vmem:[%s1 + $0x70] sm:$0xff]
    %v751 = vld [vmem:[%s1 + $0x78] sm:$0xff]
    %v752 = vld [vmem:[%s1 + $0x80] sm:$0xff]
    %v753 = vld [vmem:[%s1 + $0x88] sm:$0xff]
    %v754 = vld [vmem:[%s1 + $0x90] sm:$0xff]
    %v755 = vld [vmem:[%s1 + $0x98] sm:$0xff]
    %v756 = vld [vmem:[%s1 + $0xa0] sm:$0xff]
    %v757 = vld [vmem:[%s1 + $0xa8] sm:$0xff]
    %v758 = vld [vmem:[%s1 + $0xb0] sm:$0xff]
    %v759 = vld [vmem:[%s1 + $0xb8] sm:$0xff]
    %v760 = vld [vmem:[#allocation2 + $0x7] sm:$0xff]
    %v761 = vld [vmem:[#allocation2 + $0xf] sm:$0xff]
    %v762 = vld [vmem:[#allocation2 + $0x17] sm:$0xff]
    %v763 = vld [vmem:[#allocation2 + $0x1f] sm:$0xff]
    %v764 = vld [vmem:[#allocation2 + $0x8] sm:$0xff]
    %v765 = vld [vmem:[#allocation2 + $0x10] sm:$0xff]
    %v766 = vld [vmem:[#allocation2 + $0x18] sm:$0xff]
    %v767 = vld [vmem:[#allocation2 + $0x20] sm:$0xff]
    %v768 = vld [vmem:[#allocation2 + $0x9] sm:$0xff]
    %v769 = vld [vmem:[#allocation2 + $0x11] sm:$0xff]
    %v770 = vld [vmem:[#allocation2 + $0x19] sm:$0xff]
    %v771 = vld [vmem:[#allocation2 + $0x21] sm:$0xff]
    %v773 = vsel %vm15, %v764, 0
    %v776 = vsel %vm15, %v765, 0
    %v779 = vsel %vm15, %v766, 0
    %v782 = vsel %vm15, %v767, 0
    %784 = vmatpush.msra.mxu0 0.0
    %785 = vmatpush.msra.mxu0 0.0
    %786 = vmatpush.msra.mxu0 0.0
    %787 = vmatpush.msra.mxu0 0.0
    %788 = vmatpush.msra.mxu0 0.0
    %789 = vmatpush.msra.mxu0 0.0
    %790 = vmatpush.msra.mxu0 0.0
    %791 = vmatpush.msra.mxu0 0.0
    %792 = vmatpush.msra.mxu0 0.0
    %793 = vmatpush.msra.mxu0 0.0
    %794 = vmatpush.msra.mxu0 0.0
    %795 = vmatpush.msra.mxu0 0.0
    %796 = vmatpush.msra.mxu0 %v755
    %797 = vmatpush.msra.mxu0 %v754
    %798 = vmatpush.msra.mxu0 %v753
    %799 = vmatpush.msra.mxu0 %v752
    %800 = vmatmul.f32.gmra.mxu0 %v773
    %v801 = vpop.f32.mrf.mxu0
    %v802 = vadd.f32 0.0, %v801
    %803 = vmatmul.f32.gmra.mxu0 %v776
    %v804 = vpop.f32.mrf.mxu0
    %v805 = vadd.f32 0.0, %v804
    %806 = vmatmul.f32.gmra.mxu0 %v779
    %v807 = vpop.f32.mrf.mxu0
    %v808 = vadd.f32 0.0, %v807
    %809 = vmatmul.f32.gmra.mxu0 %v782
    %v810 = vpop.f32.mrf.mxu0
    %v811 = vadd.f32 0.0, %v810
    %812 = vdwg.mxu0
    %v814 = vsel %vm15, %v760, 0
    %v817 = vsel %vm15, %v761, 0
    %v820 = vsel %vm15, %v762, 0
    %v823 = vsel %vm15, %v763, 0
    %825 = vmatpush.msra.mxu0 0.0
    %826 = vmatpush.msra.mxu0 0.0
    %827 = vmatpush.msra.mxu0 0.0
    %828 = vmatpush.msra.mxu0 0.0
    %829 = vmatpush.msra.mxu0 0.0
    %830 = vmatpush.msra.mxu0 0.0
    %831 = vmatpush.msra.mxu0 0.0
    %832 = vmatpush.msra.mxu0 0.0
    %833 = vmatpush.msra.mxu0 0.0
    %834 = vmatpush.msra.mxu0 0.0
    %835 = vmatpush.msra.mxu0 0.0
    %836 = vmatpush.msra.mxu0 0.0
    %837 = vmatpush.msra.mxu0 %v751
    %838 = vmatpush.msra.mxu0 %v750
    %839 = vmatpush.msra.mxu0 %v749
    %840 = vmatpush.msra.mxu0 %v748
    %841 = vmatmul.f32.gmra.mxu0 %v814
    %v842 = vpop.f32.mrf.mxu0
    %v843 = vadd.f32 %v802, %v842
    %844 = vmatmul.f32.gmra.mxu0 %v817
    %v845 = vpop.f32.mrf.mxu0
    %v846 = vadd.f32 %v805, %v845
    %847 = vmatmul.f32.gmra.mxu0 %v820
    %v848 = vpop.f32.mrf.mxu0
    %v849 = vadd.f32 %v808, %v848
    %850 = vmatmul.f32.gmra.mxu0 %v823
    %v851 = vpop.f32.mrf.mxu0
    %v852 = vadd.f32 %v811, %v851
    %853 = vdwg.mxu0
    %v855 = vsel %vm15, %v768, 0
    %v858 = vsel %vm15, %v769, 0
    %v861 = vsel %vm15, %v770, 0
    %v864 = vsel %vm15, %v771, 0
    %866 = vmatpush.msra.mxu0 0.0
    %867 = vmatpush.msra.mxu0 0.0
    %868 = vmatpush.msra.mxu0 0.0
    %869 = vmatpush.msra.mxu0 0.0
    %870 = vmatpush.msra.mxu0 0.0
    %871 = vmatpush.msra.mxu0 0.0
    %872 = vmatpush.msra.mxu0 0.0
    %873 = vmatpush.msra.mxu0 0.0
    %874 = vmatpush.msra.mxu0 0.0
    %875 = vmatpush.msra.mxu0 0.0
    %876 = vmatpush.msra.mxu0 0.0
    %877 = vmatpush.msra.mxu0 0.0
    %878 = vmatpush.msra.mxu0 %v759
    %879 = vmatpush.msra.mxu0 %v758
    %880 = vmatpush.msra.mxu0 %v757
    %881 = vmatpush.msra.mxu0 %v756
    %882 = vmatmul.f32.gmra.mxu0 %v855
    %v883 = vpop.f32.mrf.mxu0
    %v884 = vadd.f32 0.0, %v883
    %885 = vmatmul.f32.gmra.mxu0 %v858
    %v886 = vpop.f32.mrf.mxu0
    %v887 = vadd.f32 0.0, %v886
    %888 = vmatmul.f32.gmra.mxu0 %v861
    %v889 = vpop.f32.mrf.mxu0
    %v890 = vadd.f32 0.0, %v889
    %891 = vmatmul.f32.gmra.mxu0 %v864
    %v892 = vpop.f32.mrf.mxu0
    %v893 = vadd.f32 0.0, %v892
    %894 = vdwg.mxu0
    %v895 = vadd.f32 %v843, %v884
    %v896 = vadd.f32 %v846, %v887
    %v897 = vadd.f32 %v849, %v890
    %v898 = vadd.f32 %v852, %v893
    %v899 = vmul.f32 %v895, %v895
    %v900 = vmul.f32 %v896, %v896
    %v901 = vmul.f32 %v897, %v897
    %v902 = vmul.f32 %v898, %v898
    %v903 = vld [vmem:[#allocation2 + $0x2f] sm:$0xff]
    %v904 = vld [vmem:[#allocation2 + $0x37] sm:$0xff]
    %v905 = vld [vmem:[#allocation2 + $0x3f] sm:$0xff]
    %v906 = vld [vmem:[#allocation2 + $0x47] sm:$0xff]
    %v907 = vld [vmem:[#allocation2 + $0x30] sm:$0xff]
    %v908 = vld [vmem:[#allocation2 + $0x38] sm:$0xff]
    %v909 = vld [vmem:[#allocation2 + $0x40] sm:$0xff]
    %v910 = vld [vmem:[#allocation2 + $0x48] sm:$0xff]
    %v911 = vld [vmem:[#allocation2 + $0x31] sm:$0xff]
    %v912 = vld [vmem:[#allocation2 + $0x39] sm:$0xff]
    %v913 = vld [vmem:[#allocation2 + $0x41] sm:$0xff]
    %v914 = vld [vmem:[#allocation2 + $0x49] sm:$0xff]
    %v916 = vsel %vm15, %v907, 0
    %v919 = vsel %vm15, %v908, 0
    %v922 = vsel %vm15, %v909, 0
    %v925 = vsel %vm15, %v910, 0
    %927 = vmatpush.msra.mxu0 0.0
    %928 = vmatpush.msra.mxu0 0.0
    %929 = vmatpush.msra.mxu0 0.0
    %930 = vmatpush.msra.mxu0 0.0
    %931 = vmatpush.msra.mxu0 0.0
    %932 = vmatpush.msra.mxu0 0.0
    %933 = vmatpush.msra.mxu0 0.0
    %934 = vmatpush.msra.mxu0 0.0
    %935 = vmatpush.msra.mxu0 0.0
    %936 = vmatpush.msra.mxu0 0.0
    %937 = vmatpush.msra.mxu0 0.0
    %938 = vmatpush.msra.mxu0 0.0
    %939 = vmatpush.msra.mxu0 %v755
    %940 = vmatpush.msra.mxu0 %v754
    %941 = vmatpush.msra.mxu0 %v753
    %942 = vmatpush.msra.mxu0 %v752
    %943 = vmatmul.f32.gmra.mxu0 %v916
    %v944 = vpop.f32.mrf.mxu0
    %v945 = vadd.f32 0.0, %v944
    %946 = vmatmul.f32.gmra.mxu0 %v919
    %v947 = vpop.f32.mrf.mxu0
    %v948 = vadd.f32 0.0, %v947
    %949 = vmatmul.f32.gmra.mxu0 %v922
    %v950 = vpop.f32.mrf.mxu0
    %v951 = vadd.f32 0.0, %v950
    %952 = vmatmul.f32.gmra.mxu0 %v925
    %v953 = vpop.f32.mrf.mxu0
    %v954 = vadd.f32 0.0, %v953
    %955 = vdwg.mxu0
    %v957 = vsel %vm15, %v903, 0
    %v960 = vsel %vm15, %v904, 0
    %v963 = vsel %vm15, %v905, 0
    %v966 = vsel %vm15, %v906, 0
    %968 = vmatpush.msra.mxu0 0.0
    %969 = vmatpush.msra.mxu0 0.0
    %970 = vmatpush.msra.mxu0 0.0
    %971 = vmatpush.msra.mxu0 0.0
    %972 = vmatpush.msra.mxu0 0.0
    %973 = vmatpush.msra.mxu0 0.0
    %974 = vmatpush.msra.mxu0 0.0
    %975 = vmatpush.msra.mxu0 0.0
    %976 = vmatpush.msra.mxu0 0.0
    %977 = vmatpush.msra.mxu0 0.0
    %978 = vmatpush.msra.mxu0 0.0
    %979 = vmatpush.msra.mxu0 0.0
    %980 = vmatpush.msra.mxu0 %v751
    %981 = vmatpush.msra.mxu0 %v750
    %982 = vmatpush.msra.mxu0 %v749
    %983 = vmatpush.msra.mxu0 %v748
    %984 = vmatmul.f32.gmra.mxu0 %v957
    %v985 = vpop.f32.mrf.mxu0
    %v986 = vadd.f32 %v945, %v985
    %987 = vmatmul.f32.gmra.mxu0 %v960
    %v988 = vpop.f32.mrf.mxu0
    %v989 = vadd.f32 %v948, %v988
    %990 = vmatmul.f32.gmra.mxu0 %v963
    %v991 = vpop.f32.mrf.mxu0
    %v992 = vadd.f32 %v951, %v991
    %993 = vmatmul.f32.gmra.mxu0 %v966
    %v994 = vpop.f32.mrf.mxu0
    %v995 = vadd.f32 %v954, %v994
    %996 = vdwg.mxu0
    %v998 = vsel %vm15, %v911, 0
    %v1001 = vsel %vm15, %v912, 0
    %v1004 = vsel %vm15, %v913, 0
    %v1007 = vsel %vm15, %v914, 0
    %1009 = vmatpush.msra.mxu0 0.0
    %1010 = vmatpush.msra.mxu0 0.0
    %1011 = vmatpush.msra.mxu0 0.0
    %1012 = vmatpush.msra.mxu0 0.0
    %1013 = vmatpush.msra.mxu0 0.0
    %1014 = vmatpush.msra.mxu0 0.0
    %1015 = vmatpush.msra.mxu0 0.0
    %1016 = vmatpush.msra.mxu0 0.0
    %1017 = vmatpush.msra.mxu0 0.0
    %1018 = vmatpush.msra.mxu0 0.0
    %1019 = vmatpush.msra.mxu0 0.0
    %1020 = vmatpush.msra.mxu0 0.0
    %1021 = vmatpush.msra.mxu0 %v759
    %1022 = vmatpush.msra.mxu0 %v758
    %1023 = vmatpush.msra.mxu0 %v757
    %1024 = vmatpush.msra.mxu0 %v756
    %1025 = vmatmul.f32.gmra.mxu0 %v998
    %v1026 = vpop.f32.mrf.mxu0
    %v1027 = vadd.f32 0.0, %v1026
    %1028 = vmatmul.f32.gmra.mxu0 %v1001
    %v1029 = vpop.f32.mrf.mxu0
    %v1030 = vadd.f32 0.0, %v1029
    %1031 = vmatmul.f32.gmra.mxu0 %v1004
    %v1032 = vpop.f32.mrf.mxu0
    %v1033 = vadd.f32 0.0, %v1032
    %1034 = vmatmul.f32.gmra.mxu0 %v1007
    %v1035 = vpop.f32.mrf.mxu0
    %v1036 = vadd.f32 0.0, %v1035
    %1037 = vdwg.mxu0
    %v1038 = vadd.f32 %v986, %v1027
    %v1039 = vadd.f32 %v989, %v1030
    %v1040 = vadd.f32 %v992, %v1033
    %v1041 = vadd.f32 %v995, %v1036
    %v1042 = vsel %vm15, 1.0, 0
    %1044 = vmatpush.msra.mxu0 0.0
    %1045 = vmatpush.msra.mxu0 0.0
    %1046 = vmatpush.msra.mxu0 0.0
    %1047 = vmatpush.msra.mxu0 0.0
    %1048 = vmatpush.msra.mxu0 0.0
    %1049 = vmatpush.msra.mxu0 0.0
    %1050 = vmatpush.msra.mxu0 0.0
    %1051 = vmatpush.msra.mxu0 0.0
    %1052 = vmatpush.msra.mxu0 0.0
    %1053 = vmatpush.msra.mxu0 0.0
    %1054 = vmatpush.msra.mxu0 0.0
    %1055 = vmatpush.msra.mxu0 0.0
    %1056 = vmatpush.msra.mxu0 %v1041
    %1057 = vmatpush.msra.mxu0 %v1040
    %1058 = vmatpush.msra.mxu0 %v1039
    %1059 = vmatpush.msra.mxu0 %v1038
    %1060 = vmatmul.f32.gmra.mxu0 %v1042
    %v1061 = vpop.f32.mrf.mxu0
    %v1062 = vadd.f32 0.0, %v1061
    %1063 = vdwg.mxu0
    %1064 = vmatpush.msra.mxu0 0.0
    %1065 = vmatpush.msra.mxu0 0.0
    %1066 = vmatpush.msra.mxu0 0.0
    %1067 = vmatpush.msra.mxu0 0.0
    %1068 = vmatpush.msra.mxu0 0.0
    %1069 = vmatpush.msra.mxu0 0.0
    %1070 = vmatpush.msra.mxu0 0.0
    %1071 = vmatpush.msra.mxu0 0.0
    %1072 = vmatpush.msra.mxu0 0.0
    %1073 = vmatpush.msra.mxu0 0.0
    %1074 = vmatpush.msra.mxu0 0.0
    %1075 = vmatpush.msra.mxu0 0.0
    %1076 = vmatpush.msra.mxu0 %v898
    %1077 = vmatpush.msra.mxu0 %v897
    %1078 = vmatpush.msra.mxu0 %v896
    %1079 = vmatpush.msra.mxu0 %v895
    %1080 = vmatmul.f32.gmra.mxu0 %v1042
    %v1081 = vpop.f32.mrf.mxu0
    %v1082 = vadd.f32 %v1062, %v1081
    %1083 = vdwg.mxu0
    %v1084 = vmul.f32 %v1038, %v1038
    %v1085 = vmul.f32 %v1039, %v1039
    %v1086 = vmul.f32 %v1040, %v1040
    %v1087 = vmul.f32 %v1041, %v1041
    %1088 = vmatpush.msra.mxu0 0.0
    %1089 = vmatpush.msra.mxu0 0.0
    %1090 = vmatpush.msra.mxu0 0.0
    %1091 = vmatpush.msra.mxu0 0.0
    %1092 = vmatpush.msra.mxu0 0.0
    %1093 = vmatpush.msra.mxu0 0.0
    %1094 = vmatpush.msra.mxu0 0.0
    %1095 = vmatpush.msra.mxu0 0.0
    %1096 = vmatpush.msra.mxu0 0.0
    %1097 = vmatpush.msra.mxu0 0.0
    %1098 = vmatpush.msra.mxu0 0.0
    %1099 = vmatpush.msra.mxu0 0.0
    %1100 = vmatpush.msra.mxu0 %v1087
    %1101 = vmatpush.msra.mxu0 %v1086
    %1102 = vmatpush.msra.mxu0 %v1085
    %1103 = vmatpush.msra.mxu0 %v1084
    %1104 = vmatmul.f32.gmra.mxu0 %v1042
    %v1105 = vpop.f32.mrf.mxu0
    %v1106 = vadd.f32 0.0, %v1105
    %1107 = vdwg.mxu0
    %1108 = vmatpush.msra.mxu0 0.0
    %1109 = vmatpush.msra.mxu0 0.0
    %1110 = vmatpush.msra.mxu0 0.0
    %1111 = vmatpush.msra.mxu0 0.0
    %1112 = vmatpush.msra.mxu0 0.0
    %1113 = vmatpush.msra.mxu0 0.0
    %1114 = vmatpush.msra.mxu0 0.0
    %1115 = vmatpush.msra.mxu0 0.0
    %1116 = vmatpush.msra.mxu0 0.0
    %1117 = vmatpush.msra.mxu0 0.0
    %1118 = vmatpush.msra.mxu0 0.0
    %1119 = vmatpush.msra.mxu0 0.0
    %1120 = vmatpush.msra.mxu0 %v902
    %1121 = vmatpush.msra.mxu0 %v901
    %1122 = vmatpush.msra.mxu0 %v900
    %1123 = vmatpush.msra.mxu0 %v899
    %1124 = vmatmul.f32.gmra.mxu0 %v1042
    %v1125 = vpop.f32.mrf.mxu0
    %v1126 = vadd.f32 %v1106, %v1125
    %1127 = vdwg.mxu0
    %v1128 = vmul.f32 %v1082, 0.015625
    %v1129 = vmul.f32 %v1126, 0.015625
    %v1130 = vmul.f32 %v1128, %v1128
    %v1131 = vsub.f32 %v1129, %v1130
    %v1132 = vmax.f32 %v1131, 0.0
    %v1133 = vld [vmem:[%s2 + $0x2] sm:$0x3]
    %v1134 = vadd.f32 %v1132, 1e-05
    %v1135 = vrsqrt.pop %v1134
    %v1136 = vmul.f32 %v1135, %v1134
    %v1137 = vmul.f32 %v1136, %v1135
    %v1138 = vmul.f32 0.5, %v1137
    %v1139 = vsub.f32 1.5, %v1138
    %v1140 = vmul.f32 %v1135, %v1139
    %vm1141 = vweird.f32 %v1134
    %vm1142 = vweird.f32 %v1135
    %vm1143 = vmor %vm1141, %vm1142
    %v1144 = vsel %vm1143, %v1135, %v1140
    %v1145 = vmul.f32 %v1133, %v1144
    %v1146 = vmul.f32 %v1128, %v1145
    %v1148 = vrot.slane %v1146, 7
    %v1150 = vsub.f32 %v1133, %v1148
    %v1151 = vperm.slane %v1145, 0
    %v1152 = vmul.f32 %v895, %v1151
    %v1153 = vmul.f32 %v896, %v1151
    %v1154 = vmul.f32 %v897, %v1151
    %v1155 = vmul.f32 %v898, %v1151
    %v1156 = vperm.slane %v1150, 1
    %v1157 = vadd.f32 %v1152, %v1156
    %v1158 = vadd.f32 %v1153, %v1156
    %v1159 = vadd.f32 %v1154, %v1156
    %v1160 = vadd.f32 %v1155, %v1156
    %v1161 = vmax.f32 %v1157, 0.0
    %v1162 = vmax.f32 %v1158, 0.0
    %v1163 = vmax.f32 %v1159, 0.0
    %v1164 = vmax.f32 %v1160, 0.0
    %1165 = vst.msk [vmem:[#allocation3] sm:$0xff] %vm15, %v1161
    %1166 = vst.msk [vmem:[#allocation3 + $0x8] sm:$0xff] %vm15, %v1162
    %1167 = vst.msk [vmem:[#allocation3 + $0x10] sm:$0xff] %vm15, %v1163
    %1168 = vst.msk [vmem:[#allocation3 + $0x18] sm:$0xff] %vm15, %v1164
    %v1169 = vld [vmem:[#allocation3] ss:$2 sm:$0xff]
    %v1170 = vld [vmem:[%s675] ss:$2 sm:$0xff]
    %v1171 = vld [vmem:[%s681] ss:$2 sm:$0xff]
    %v1172 = vld [vmem:[%s683] ss:$2 sm:$0xff]
    %v1173 = vmax.f32 %v1169, %v1171
    %v1174 = vmax.f32 %v1170, %v1172
    %1175 = vst.msk [vmem:[#allocation2 + $0x8] sm:$0xff] %vm15, %v1173
    %1176 = vst.msk [vmem:[#allocation2 + $0x10] sm:$0xff] %vm15, %v1174
    %v1177 = vmul.f32 %v1038, %v1151
    %v1178 = vmul.f32 %v1039, %v1151
    %v1179 = vmul.f32 %v1040, %v1151
    %v1180 = vmul.f32 %v1041, %v1151
    %v1181 = vadd.f32 %v1177, %v1156
    %v1182 = vadd.f32 %v1178, %v1156
    %v1183 = vadd.f32 %v1179, %v1156
    %v1184 = vadd.f32 %v1180, %v1156
    %v1185 = vmax.f32 %v1181, 0.0
    %v1186 = vmax.f32 %v1182, 0.0
    %v1187 = vmax.f32 %v1183, 0.0
    %v1188 = vmax.f32 %v1184, 0.0
    %1189 = vst.msk [vmem:[#allocation3] sm:$0xff] %vm15, %v1185
    %1190 = vst.msk [vmem:[#allocation3 + $0x8] sm:$0xff] %vm15, %v1186
    %1191 = vst.msk [vmem:[#allocation3 + $0x10] sm:$0xff] %vm15, %v1187
    %1192 = vst.msk [vmem:[#allocation3 + $0x18] sm:$0xff] %vm15, %v1188
    %v1193 = vld [vmem:[#allocation3] ss:$2 sm:$0xff]
    %v1194 = vld [vmem:[%s675] ss:$2 sm:$0xff]
    %v1195 = vld [vmem:[%s681] ss:$2 sm:$0xff]
    %v1196 = vld [vmem:[%s683] ss:$2 sm:$0xff]
    %v1197 = vmax.f32 %v1193, %v1195
    %v1198 = vmax.f32 %v1194, %v1196
    %1199 = vst.msk [vmem:[#allocation2 + $0x20] sm:$0xff] %vm15, %v1197
    %1200 = vst.msk [vmem:[#allocation2 + $0x28] sm:$0xff] %vm15, %v1198
    %1201 = vst.msk [vmem:[#allocation2] sm:$0xff] %vm15, 0.0
    %1202 = vst.msk [vmem:[#allocation2 + $0x18] sm:$0xff] %vm15, 0.0
    %1203 = vst.msk [vmem:[#allocation2 + $0x30] sm:$0xff] %vm15, 0.0
    %v1204 = vld [vmem:[%s1 + $0xc0] sm:$0xff]
    %v1205 = vld [vmem:[%s1 + $0xc8] sm:$0xff]
    %v1206 = vld [vmem:[%s1 + $0xd0] sm:$0xff]
    %v1207 = vld [vmem:[%s1 + $0xd8] sm:$0xff]
    %v1208 = vld [vmem:[%s1 + $0xe0] sm:$0xff]
    %v1209 = vld [vmem:[%s1 + $0xe8] sm:$0xff]
    %v1210 = vld [vmem:[%s1 + $0xf0] sm:$0xff]
    %v1211 = vld [vmem:[%s1 + $0xf8] sm:$0xff]
    %v1212 = vld [vmem:[%s1 + $0x100] sm:$0xff]
    %v1213 = vld [vmem:[%s1 + $0x108] sm:$0xff]
    %v1214 = vld [vmem:[%s1 + $0x110] sm:$0xff]
    %v1215 = vld [vmem:[%s1 + $0x118] sm:$0xff]
    %v1216 = vld [vmem:[#allocation2 + $0x7] sm:$0xff]
    %v1217 = vld [vmem:[#allocation2 + $0xf] sm:$0xff]
    %v1218 = vld [vmem:[#allocation2 + $0x8] sm:$0xff]
    %v1219 = vld [vmem:[#allocation2 + $0x10] sm:$0xff]
    %v1220 = vld [vmem:[#allocation2 + $0x9] sm:$0xff]
    %v1221 = vld [vmem:[#allocation2 + $0x11] sm:$0xff]
    %v1223 = vsel %vm15, %v1218, 0
    %v1226 = vsel %vm15, %v1219, 0
    %1228 = vmatpush.msra.mxu0 0.0
    %1229 = vmatpush.msra.mxu0 0.0
    %1230 = vmatpush.msra.mxu0 0.0
    %1231 = vmatpush.msra.mxu0 0.0
    %1232 = vmatpush.msra.mxu0 0.0
    %1233 = vmatpush.msra.mxu0 0.0
    %1234 = vmatpush.msra.mxu0 0.0
    %1235 = vmatpush.msra.mxu0 0.0
    %1236 = vmatpush.msra.mxu0 0.0
    %1237 = vmatpush.msra.mxu0 0.0
    %1238 = vmatpush.msra.mxu0 0.0
    %1239 = vmatpush.msra.mxu0 0.0
    %1240 = vmatpush.msra.mxu0 %v1211
    %1241 = vmatpush.msra.mxu0 %v1210
    %1242 = vmatpush.msra.mxu0 %v1209
    %1243 = vmatpush.msra.mxu0 %v1208
    %1244 = vmatmul.f32.gmra.mxu0 %v1223
    %v1245 = vpop.f32.mrf.mxu0
    %v1246 = vadd.f32 0.0, %v1245
    %1247 = vmatmul.f32.gmra.mxu0 %v1226
    %v1248 = vpop.f32.mrf.mxu0
    %v1249 = vadd.f32 0.0, %v1248
    %1250 = vdwg.mxu0
    %v1252 = vsel %vm15, %v1216, 0
    %v1255 = vsel %vm15, %v1217, 0
    %1257 = vmatpush.msra.mxu0 0.0
    %1258 = vmatpush.msra.mxu0 0.0
    %1259 = vmatpush.msra.mxu0 0.0
    %1260 = vmatpush.msra.mxu0 0.0
    %1261 = vmatpush.msra.mxu0 0.0
    %1262 = vmatpush.msra.mxu0 0.0
    %1263 = vmatpush.msra.mxu0 0.0
    %1264 = vmatpush.msra.mxu0 0.0
    %1265 = vmatpush.msra.mxu0 0.0
    %1266 = vmatpush.msra.mxu0 0.0
    %1267 = vmatpush.msra.mxu0 0.0
    %1268 = vmatpush.msra.mxu0 0.0
    %1269 = vmatpush.msra.mxu0 %v1207
    %1270 = vmatpush.msra.mxu0 %v1206
    %1271 = vmatpush.msra.mxu0 %v1205
    %1272 = vmatpush.msra.mxu0 %v1204
    %1273 = vmatmul.f32.gmra.mxu0 %v1252
    %v1274 = vpop.f32.mrf.mxu0
    %v1275 = vadd.f32 %v1246, %v1274
    %1276 = vmatmul.f32.gmra.mxu0 %v1255
    %v1277 = vpop.f32.mrf.mxu0
    %v1278 = vadd.f32 %v1249, %v1277
    %1279 = vdwg.mxu0
    %v1281 = vsel %vm15, %v1220, 0
    %v1284 = vsel %vm15, %v1221, 0
    %1286 = vmatpush.msra.mxu0 0.0
    %1287 = vmatpush.msra.mxu0 0.0
    %1288 = vmatpush.msra.mxu0 0.0
    %1289 = vmatpush.msra.mxu0 0.0
    %1290 = vmatpush.msra.mxu0 0.0
    %1291 = vmatpush.msra.mxu0 0.0
    %1292 = vmatpush.msra.mxu0 0.0
    %1293 = vmatpush.msra.mxu0 0.0
    %1294 = vmatpush.msra.mxu0 0.0
    %1295 = vmatpush.msra.mxu0 0.0
    %1296 = vmatpush.msra.mxu0 0.0
    %1297 = vmatpush.msra.mxu0 0.0
    %1298 = vmatpush.msra.mxu0 %v1215
    %1299 = vmatpush.msra.mxu0 %v1214
    %1300 = vmatpush.msra.mxu0 %v1213
    %1301 = vmatpush.msra.mxu0 %v1212
    %1302 = vmatmul.f32.gmra.mxu0 %v1281
    %v1303 = vpop.f32.mrf.mxu0
    %v1304 = vadd.f32 0.0, %v1303
    %1305 = vmatmul.f32.gmra.mxu0 %v1284
    %v1306 = vpop.f32.mrf.mxu0
    %v1307 = vadd.f32 0.0, %v1306
    %1308 = vdwg.mxu0
    %v1309 = vadd.f32 %v1275, %v1304
    %v1310 = vadd.f32 %v1278, %v1307
    %v1311 = vmul.f32 %v1309, %v1309
    %v1312 = vmul.f32 %v1310, %v1310
    %v1313 = vld [vmem:[#allocation2 + $0x1f] sm:$0xff]
    %v1314 = vld [vmem:[#allocation2 + $0x27] sm:$0xff]
    %v1315 = vld [vmem:[#allocation2 + $0x20] sm:$0xff]
    %v1316 = vld [vmem:[#allocation2 + $0x28] sm:$0xff]
    %v1317 = vld [vmem:[#allocation2 + $0x21] sm:$0xff]
    %v1318 = vld [vmem:[#allocation2 + $0x29] sm:$0xff]
    %v1320 = vsel %vm15, %v1315, 0
    %v1323 = vsel %vm15, %v1316, 0
    %1325 = vmatpush.msra.mxu0 0.0
    %1326 = vmatpush.msra.mxu0 0.0
    %1327 = vmatpush.msra.mxu0 0.0
    %1328 = vmatpush.msra.mxu0 0.0
    %1329 = vmatpush.msra.mxu0 0.0
    %1330 = vmatpush.msra.mxu0 0.0
    %1331 = vmatpush.msra.mxu0 0.0
    %1332 = vmatpush.msra.mxu0 0.0
    %1333 = vmatpush.msra.mxu0 0.0
    %1334 = vmatpush.msra.mxu0 0.0
    %1335 = vmatpush.msra.mxu0 0.0
    %1336 = vmatpush.msra.mxu0 0.0
    %1337 = vmatpush.msra.mxu0 %v1211
    %1338 = vmatpush.msra.mxu0 %v1210
    %1339 = vmatpush.msra.mxu0 %v1209
    %1340 = vmatpush.msra.mxu0 %v1208
    %1341 = vmatmul.f32.gmra.mxu0 %v1320
    %v1342 = vpop.f32.mrf.mxu0
    %v1343 = vadd.f32 0.0, %v1342
    %1344 = vmatmul.f32.gmra.mxu0 %v1323
    %v1345 = vpop.f32.mrf.mxu0
    %v1346 = vadd.f32 0.0, %v1345
    %1347 = vdwg.mxu0
    %v1349 = vsel %vm15, %v1313, 0
    %v1352 = vsel %vm15, %v1314, 0
    %1354 = vmatpush.msra.mxu0 0.0
    %1355 = vmatpush.msra.mxu0 0.0
    %1356 = vmatpush.msra.mxu0 0.0
    %1357 = vmatpush.msra.mxu0 0.0
    %1358 = vmatpush.msra.mxu0 0.0
    %1359 = vmatpush.msra.mxu0 0.0
    %1360 = vmatpush.msra.mxu0 0.0
    %1361 = vmatpush.msra.mxu0 0.0
    %1362 = vmatpush.msra.mxu0 0.0
    %1363 = vmatpush.msra.mxu0 0.0
    %1364 = vmatpush.msra.mxu0 0.0
    %1365 = vmatpush.msra.mxu0 0.0
    %1366 = vmatpush.msra.mxu0 %v1207
    %1367 = vmatpush.msra.mxu0 %v1206
    %1368 = vmatpush.msra.mxu0 %v1205
    %1369 = vmatpush.msra.mxu0 %v1204
    %1370 = vmatmul.f32.gmra.mxu0 %v1349
    %v1371 = vpop.f32.mrf.mxu0
    %v1372 = vadd.f32 %v1343, %v1371
    %1373 = vmatmul.f32.gmra.mxu0 %v1352
    %v1374 = vpop.f32.mrf.mxu0
    %v1375 = vadd.f32 %v1346, %v1374
    %1376 = vdwg.mxu0
    %v1378 = vsel %vm15, %v1317, 0
    %v1381 = vsel %vm15, %v1318, 0
    %1383 = vmatpush.msra.mxu0 0.0
    %1384 = vmatpush.msra.mxu0 0.0
    %1385 = vmatpush.msra.mxu0 0.0
    %1386 = vmatpush.msra.mxu0 0.0
    %1387 = vmatpush.msra.mxu0 0.0
    %1388 = vmatpush.msra.mxu0 0.0
    %1389 = vmatpush.msra.mxu0 0.0
    %1390 = vmatpush.msra.mxu0 0.0
    %1391 = vmatpush.msra.mxu0 0.0
    %1392 = vmatpush.msra.mxu0 0.0
    %1393 = vmatpush.msra.mxu0 0.0
    %1394 = vmatpush.msra.mxu0 0.0
    %1395 = vmatpush.msra.mxu0 %v1215
    %1396 = vmatpush.msra.mxu0 %v1214
    %1397 = vmatpush.msra.mxu0 %v1213
    %1398 = vmatpush.msra.mxu0 %v1212
    %1399 = vmatmul.f32.gmra.mxu0 %v1378
    %v1400 = vpop.f32.mrf.mxu0
    %v1401 = vadd.f32 0.0, %v1400
    %1402 = vmatmul.f32.gmra.mxu0 %v1381
    %v1403 = vpop.f32.mrf.mxu0
    %v1404 = vadd.f32 0.0, %v1403
    %1405 = vdwg.mxu0
    %v1406 = vadd.f32 %v1372, %v1401
    %v1407 = vadd.f32 %v1375, %v1404
    %vm1408 = vcmask 130048
    %v1409 = vsel %vm1408, 1.0, 0
    %1411 = vmatpush.msra.mxu0 0.0
    %1412 = vmatpush.msra.mxu0 0.0
    %1413 = vmatpush.msra.mxu0 0.0
    %1414 = vmatpush.msra.mxu0 0.0
    %1415 = vmatpush.msra.mxu0 0.0
    %1416 = vmatpush.msra.mxu0 0.0
    %1417 = vmatpush.msra.mxu0 0.0
    %1418 = vmatpush.msra.mxu0 0.0
    %1419 = vmatpush.msra.mxu0 0.0
    %1420 = vmatpush.msra.mxu0 0.0
    %1421 = vmatpush.msra.mxu0 0.0
    %1422 = vmatpush.msra.mxu0 0.0
    %1423 = vmatpush.msra.mxu0 0.0
    %1424 = vmatpush.msra.mxu0 0.0
    %1425 = vmatpush.msra.mxu0 %v1407
    %1426 = vmatpush.msra.mxu0 %v1406
    %1427 = vmatmul.f32.gmra.mxu0 %v1409
    %v1428 = vpop.f32.mrf.mxu0
    %v1429 = vadd.f32 0.0, %v1428
    %1430 = vdwg.mxu0
    %1431 = vmatpush.msra.mxu0 0.0
    %1432 = vmatpush.msra.mxu0 0.0
    %1433 = vmatpush.msra.mxu0 0.0
    %1434 = vmatpush.msra.mxu0 0.0
    %1435 = vmatpush.msra.mxu0 0.0
    %1436 = vmatpush.msra.mxu0 0.0
    %1437 = vmatpush.msra.mxu0 0.0
    %1438 = vmatpush.msra.mxu0 0.0
    %1439 = vmatpush.msra.mxu0 0.0
    %1440 = vmatpush.msra.mxu0 0.0
    %1441 = vmatpush.msra.mxu0 0.0
    %1442 = vmatpush.msra.mxu0 0.0
    %1443 = vmatpush.msra.mxu0 0.0
    %1444 = vmatpush.msra.mxu0 0.0
    %1445 = vmatpush.msra.mxu0 %v1310
    %1446 = vmatpush.msra.mxu0 %v1309
    %1447 = vmatmul.f32.gmra.mxu0 %v1409
    %v1448 = vpop.f32.mrf.mxu0
    %v1449 = vadd.f32 %v1429, %v1448
    %1450 = vdwg.mxu0
    %v1451 = vmul.f32 %v1406, %v1406
    %v1452 = vmul.f32 %v1407, %v1407
    %1453 = vmatpush.msra.mxu0 0.0
    %1454 = vmatpush.msra.mxu0 0.0
    %1455 = vmatpush.msra.mxu0 0.0
    %1456 = vmatpush.msra.mxu0 0.0
    %1457 = vmatpush.msra.mxu0 0.0
    %1458 = vmatpush.msra.mxu0 0.0
    %1459 = vmatpush.msra.mxu0 0.0
    %1460 = vmatpush.msra.mxu0 0.0
    %1461 = vmatpush.msra.mxu0 0.0
    %1462 = vmatpush.msra.mxu0 0.0
    %1463 = vmatpush.msra.mxu0 0.0
    %1464 = vmatpush.msra.mxu0 0.0
    %1465 = vmatpush.msra.mxu0 0.0
    %1466 = vmatpush.msra.mxu0 0.0
    %1467 = vmatpush.msra.mxu0 %v1452
    %1468 = vmatpush.msra.mxu0 %v1451
    %1469 = vmatmul.f32.gmra.mxu0 %v1409
    %v1470 = vpop.f32.mrf.mxu0
    %v1471 = vadd.f32 0.0, %v1470
    %1472 = vdwg.mxu0
    %1473 = vmatpush.msra.mxu0 0.0
    %1474 = vmatpush.msra.mxu0 0.0
    %1475 = vmatpush.msra.mxu0 0.0
    %1476 = vmatpush.msra.mxu0 0.0
    %1477 = vmatpush.msra.mxu0 0.0
    %1478 = vmatpush.msra.mxu0 0.0
    %1479 = vmatpush.msra.mxu0 0.0
    %1480 = vmatpush.msra.mxu0 0.0
    %1481 = vmatpush.msra.mxu0 0.0
    %1482 = vmatpush.msra.mxu0 0.0
    %1483 = vmatpush.msra.mxu0 0.0
    %1484 = vmatpush.msra.mxu0 0.0
    %1485 = vmatpush.msra.mxu0 0.0
    %1486 = vmatpush.msra.mxu0 0.0
    %1487 = vmatpush.msra.mxu0 %v1312
    %1488 = vmatpush.msra.mxu0 %v1311
    %1489 = vmatmul.f32.gmra.mxu0 %v1409
    %v1490 = vpop.f32.mrf.mxu0
    %v1491 = vadd.f32 %v1471, %v1490
    %1492 = vdwg.mxu0
    %v1493 = vmul.f32 %v1449, 0.03125
    %v1494 = vmul.f32 %v1491, 0.03125
    %v1495 = vmul.f32 %v1493, %v1493
    %v1496 = vsub.f32 %v1494, %v1495
    %v1497 = vmax.f32 %v1496, 0.0
    %v1498 = vld [vmem:[%s2 + $0x4] sm:$0x3]
    %v1499 = vadd.f32 %v1497, 1e-05
    %v1500 = vrsqrt.pop %v1499
    %v1501 = vmul.f32 %v1500, %v1499
    %v1502 = vmul.f32 %v1501, %v1500
    %v1503 = vmul.f32 0.5, %v1502
    %v1504 = vsub.f32 1.5, %v1503
    %v1505 = vmul.f32 %v1500, %v1504
    %vm1506 = vweird.f32 %v1499
    %vm1507 = vweird.f32 %v1500
    %vm1508 = vmor %vm1506, %vm1507
    %v1509 = vsel %vm1508, %v1500, %v1505
    %v1510 = vmul.f32 %v1498, %v1509
    %v1511 = vmul.f32 %v1493, %v1510
    %v1513 = vrot.slane %v1511, 7
    %v1515 = vsub.f32 %v1498, %v1513
    %v1516 = vperm.slane %v1510, 0
    %v1517 = vmul.f32 %v1309, %v1516
    %v1518 = vmul.f32 %v1310, %v1516
    %v1519 = vperm.slane %v1515, 1
    %v1520 = vadd.f32 %v1517, %v1519
    %v1521 = vadd.f32 %v1518, %v1519
    %v1522 = vmax.f32 %v1520, 0.0
    %v1523 = vmax.f32 %v1521, 0.0
    %1524 = vst.msk [vmem:[#allocation3] sm:$0xff] %vm15, %v1522
    %1525 = vst.msk [vmem:[#allocation3 + $0x8] sm:$0xff] %vm15, %v1523
    %v1526 = vld [vmem:[#allocation3] ss:$2 sm:$0xff]
    %v1527 = vld [vmem:[%s681] ss:$2 sm:$0xff]
    %v1528 = vmax.f32 %v1526, %v1527
    %1529 = vst.msk [vmem:[#allocation2 + $0x8] sm:$0xff] %vm15, %v1528
    %v1530 = vmul.f32 %v1406, %v1516
    %v1531 = vmul.f32 %v1407, %v1516
    %v1532 = vadd.f32 %v1530, %v1519
    %v1533 = vadd.f32 %v1531, %v1519
    %v1534 = vmax.f32 %v1532, 0.0
    %v1535 = vmax.f32 %v1533, 0.0
    %1536 = vst.msk [vmem:[#allocation3] sm:$0xff] %vm15, %v1534
    %1537 = vst.msk [vmem:[#allocation3 + $0x8] sm:$0xff] %vm15, %v1535
    %v1538 = vld [vmem:[#allocation3] ss:$2 sm:$0xff]
    %v1539 = vld [vmem:[%s681] ss:$2 sm:$0xff]
    %v1540 = vmax.f32 %v1538, %v1539
    %1541 = vst.msk [vmem:[#allocation2 + $0x18] sm:$0xff] %vm15, %v1540
    %1542 = vst.msk [vmem:[#allocation2] sm:$0xff] %vm15, 0.0
    %1543 = vst.msk [vmem:[#allocation2 + $0x10] sm:$0xff] %vm15, 0.0
    %1544 = vst.msk [vmem:[#allocation2 + $0x20] sm:$0xff] %vm15, 0.0
    %v1545 = vld [vmem:[%s1 + $0x120] sm:$0xff]
    %v1546 = vld [vmem:[%s1 + $0x128] sm:$0xff]
    %v1547 = vld [vmem:[%s1 + $0x130] sm:$0xff]
    %v1548 = vld [vmem:[%s1 + $0x138] sm:$0xff]
    %v1549 = vld [vmem:[%s1 + $0x140] sm:$0xff]
    %v1550 = vld [vmem:[%s1 + $0x148] sm:$0xff]
    %v1551 = vld [vmem:[%s1 + $0x150] sm:$0xff]
    %v1552 = vld [vmem:[%s1 + $0x158] sm:$0xff]
    %v1553 = vld [vmem:[%s1 + $0x160] sm:$0xff]
    %v1554 = vld [vmem:[%s1 + $0x168] sm:$0xff]
    %v1555 = vld [vmem:[%s1 + $0x170] sm:$0xff]
    %v1556 = vld [vmem:[%s1 + $0x178] sm:$0xff]
    %v1557 = vld [vmem:[#allocation2 + $0x7] sm:$0xff]
    %v1558 = vld [vmem:[#allocation2 + $0x8] sm:$0xff]
    %v1559 = vld [vmem:[#allocation2 + $0x9] sm:$0xff]
    %v1561 = vsel %vm15, %v1558, 0
    %1563 = vmatpush.msra.mxu0 0.0
    %1564 = vmatpush.msra.mxu0 0.0
    %1565 = vmatpush.msra.mxu0 0.0
    %1566 = vmatpush.msra.mxu0 0.0
    %1567 = vmatpush.msra.mxu0 0.0
    %1568 = vmatpush.msra.mxu0 0.0
    %1569 = vmatpush.msra.mxu0 0.0
    %1570 = vmatpush.msra.mxu0 0.0
    %1571 = vmatpush.msra.mxu0 0.0
    %1572 = vmatpush.msra.mxu0 0.0
    %1573 = vmatpush.msra.mxu0 0.0
    %1574 = vmatpush.msra.mxu0 0.0
    %1575 = vmatpush.msra.mxu0 %v1552
    %1576 = vmatpush.msra.mxu0 %v1551
    %1577 = vmatpush.msra.mxu0 %v1550
    %1578 = vmatpush.msra.mxu0 %v1549
    %1579 = vmatmul.f32.gmra.mxu0 %v1561
    %v1580 = vpop.f32.mrf.mxu0
    %v1581 = vadd.f32 0.0, %v1580
    %1582 = vdwg.mxu0
    %v1584 = vsel %vm15, %v1557, 0
    %1586 = vmatpush.msra.mxu0 0.0
    %1587 = vmatpush.msra.mxu0 0.0
    %1588 = vmatpush.msra.mxu0 0.0
    %1589 = vmatpush.msra.mxu0 0.0
    %1590 = vmatpush.msra.mxu0 0.0
    %1591 = vmatpush.msra.mxu0 0.0
    %1592 = vmatpush.msra.mxu0 0.0
    %1593 = vmatpush.msra.mxu0 0.0
    %1594 = vmatpush.msra.mxu0 0.0
    %1595 = vmatpush.msra.mxu0 0.0
    %1596 = vmatpush.msra.mxu0 0.0
    %1597 = vmatpush.msra.mxu0 0.0
    %1598 = vmatpush.msra.mxu0 %v1548
    %1599 = vmatpush.msra.mxu0 %v1547
    %1600 = vmatpush.msra.mxu0 %v1546
    %1601 = vmatpush.msra.mxu0 %v1545
    %1602 = vmatmul.f32.gmra.mxu0 %v1584
    %v1603 = vpop.f32.mrf.mxu0
    %v1604 = vadd.f32 %v1581, %v1603
    %1605 = vdwg.mxu0
    %v1607 = vsel %vm15, %v1559, 0
    %1609 = vmatpush.msra.mxu0 0.0
    %1610 = vmatpush.msra.mxu0 0.0
    %1611 = vmatpush.msra.mxu0 0.0
    %1612 = vmatpush.msra.mxu0 0.0
    %1613 = vmatpush.msra.mxu0 0.0
    %1614 = vmatpush.msra.mxu0 0.0
    %1615 = vmatpush.msra.mxu0 0.0
    %1616 = vmatpush.msra.mxu0 0.0
    %1617 = vmatpush.msra.mxu0 0.0
    %1618 = vmatpush.msra.mxu0 0.0
    %1619 = vmatpush.msra.mxu0 0.0
    %1620 = vmatpush.msra.mxu0 0.0
    %1621 = vmatpush.msra.mxu0 %v1556
    %1622 = vmatpush.msra.mxu0 %v1555
    %1623 = vmatpush.msra.mxu0 %v1554
    %1624 = vmatpush.msra.mxu0 %v1553
    %1625 = vmatmul.f32.gmra.mxu0 %v1607
    %v1626 = vpop.f32.mrf.mxu0
    %v1627 = vadd.f32 0.0, %v1626
    %1628 = vdwg.mxu0
    %v1629 = vadd.f32 %v1604, %v1627
    %v1630 = vmul.f32 %v1629, %v1629
    %v1631 = vld [vmem:[#allocation2 + $0x17] sm:$0xff]
    %v1632 = vld [vmem:[#allocation2 + $0x18] sm:$0xff]
    %v1633 = vld [vmem:[#allocation2 + $0x19] sm:$0xff]
    %v1635 = vsel %vm15, %v1632, 0
    %1637 = vmatpush.msra.mxu0 0.0
    %1638 = vmatpush.msra.mxu0 0.0
    %1639 = vmatpush.msra.mxu0 0.0
    %1640 = vmatpush.msra.mxu0 0.0
    %1641 = vmatpush.msra.mxu0 0.0
    %1642 = vmatpush.msra.mxu0 0.0
    %1643 = vmatpush.msra.mxu0 0.0
    %1644 = vmatpush.msra.mxu0 0.0
    %1645 = vmatpush.msra.mxu0 0.0
    %1646 = vmatpush.msra.mxu0 0.0
    %1647 = vmatpush.msra.mxu0 0.0
    %1648 = vmatpush.msra.mxu0 0.0
    %1649 = vmatpush.msra.mxu0 %v1552
    %1650 = vmatpush.msra.mxu0 %v1551
    %1651 = vmatpush.msra.mxu0 %v1550
    %1652 = vmatpush.msra.mxu0 %v1549
    %1653 = vmatmul.f32.gmra.mxu0 %v1635
    %v1654 = vpop.f32.mrf.mxu0
    %v1655 = vadd.f32 0.0, %v1654
    %1656 = vdwg.mxu0
    %v1658 = vsel %vm15, %v1631, 0
    %1660 = vmatpush.msra.mxu0 0.0
    %1661 = vmatpush.msra.mxu0 0.0
    %1662 = vmatpush.msra.mxu0 0.0
    %1663 = vmatpush.msra.mxu0 0.0
    %1664 = vmatpush.msra.mxu0 0.0
    %1665 = vmatpush.msra.mxu0 0.0
    %1666 = vmatpush.msra.mxu0 0.0
    %1667 = vmatpush.msra.mxu0 0.0
    %1668 = vmatpush.msra.mxu0 0.0
    %1669 = vmatpush.msra.mxu0 0.0
    %1670 = vmatpush.msra.mxu0 0.0
    %1671 = vmatpush.msra.mxu0 0.0
    %1672 = vmatpush.msra.mxu0 %v1548
    %1673 = vmatpush.msra.mxu0 %v1547
    %1674 = vmatpush.msra.mxu0 %v1546
    %1675 = vmatpush.msra.mxu0 %v1545
    %1676 = vmatmul.f32.gmra.mxu0 %v1658
    %v1677 = vpop.f32.mrf.mxu0
    %v1678 = vadd.f32 %v1655, %v1677
    %1679 = vdwg.mxu0
    %v1681 = vsel %vm15, %v1633, 0
    %1683 = vmatpush.msra.mxu0 0.0
    %1684 = vmatpush.msra.mxu0 0.0
    %1685 = vmatpush.msra.mxu0 0.0
    %1686 = vmatpush.msra.mxu0 0.0
    %1687 = vmatpush.msra.mxu0 0.0
    %1688 = vmatpush.msra.mxu0 0.0
    %1689 = vmatpush.msra.mxu0 0.0
    %1690 = vmatpush.msra.mxu0 0.0
    %1691 = vmatpush.msra.mxu0 0.0
    %1692 = vmatpush.msra.mxu0 0.0
    %1693 = vmatpush.msra.mxu0 0.0
    %1694 = vmatpush.msra.mxu0 0.0
    %1695 = vmatpush.msra.mxu0 %v1556
    %1696 = vmatpush.msra.mxu0 %v1555
    %1697 = vmatpush.msra.mxu0 %v1554
    %1698 = vmatpush.msra.mxu0 %v1553
    %1699 = vmatmul.f32.gmra.mxu0 %v1681
    %v1700 = vpop.f32.mrf.mxu0
    %v1701 = vadd.f32 0.0, %v1700
    %1702 = vdwg.mxu0
    %v1703 = vadd.f32 %v1678, %v1701
    %vm1704 = vcmask 64512
    %v1705 = vsel %vm1704, 1.0, 0
    %1707 = vmatpush.msra.mxu0 0.0
    %1708 = vmatpush.msra.mxu0 0.0
    %1709 = vmatpush.msra.mxu0 0.0
    %1710 = vmatpush.msra.mxu0 0.0
    %1711 = vmatpush.msra.mxu0 0.0
    %1712 = vmatpush.msra.mxu0 0.0
    %1713 = vmatpush.msra.mxu0 0.0
    %1714 = vmatpush.msra.mxu0 0.0
    %1715 = vmatpush.msra.mxu0 0.0
    %1716 = vmatpush.msra.mxu0 0.0
    %1717 = vmatpush.msra.mxu0 0.0
    %1718 = vmatpush.msra.mxu0 0.0
    %1719 = vmatpush.msra.mxu0 0.0
    %1720 = vmatpush.msra.mxu0 0.0
    %1721 = vmatpush.msra.mxu0 0.0
    %1722 = vmatpush.msra.mxu0 %v1703
    %1723 = vmatmul.f32.gmra.mxu0 %v1705
    %v1724 = vpop.f32.mrf.mxu0
    %v1725 = vadd.f32 0.0, %v1724
    %1726 = vdwg.mxu0
    %1727 = vmatpush.msra.mxu0 0.0
    %1728 = vmatpush.msra.mxu0 0.0
    %1729 = vmatpush.msra.mxu0 0.0
    %1730 = vmatpush.msra.mxu0 0.0
    %1731 = vmatpush.msra.mxu0 0.0
    %1732 = vmatpush.msra.mxu0 0.0
    %1733 = vmatpush.msra.mxu0 0.0
    %1734 = vmatpush.msra.mxu0 0.0
    %1735 = vmatpush.msra.mxu0 0.0
    %1736 = vmatpush.msra.mxu0 0.0
    %1737 = vmatpush.msra.mxu0 0.0
    %1738 = vmatpush.msra.mxu0 0.0
    %1739 = vmatpush.msra.mxu0 0.0
    %1740 = vmatpush.msra.mxu0 0.0
    %1741 = vmatpush.msra.mxu0 0.0
    %1742 = vmatpush.msra.mxu0 %v1629
    %1743 = vmatmul.f32.gmra.mxu0 %v1705
    %v1744 = vpop.f32.mrf.mxu0
    %v1745 = vadd.f32 %v1725, %v1744
    %1746 = vdwg.mxu0
    %v1747 = vmul.f32 %v1703, %v1703
    %1748 = vmatpush.msra.mxu0 0.0
    %1749 = vmatpush.msra.mxu0 0.0
    %1750 = vmatpush.msra.mxu0 0.0
    %1751 = vmatpush.msra.mxu0 0.0
    %1752 = vmatpush.msra.mxu0 0.0
    %1753 = vmatpush.msra.mxu0 0.0
    %1754 = vmatpush.msra.mxu0 0.0
    %1755 = vmatpush.msra.mxu0 0.0
    %1756 = vmatpush.msra.mxu0 0.0
    %1757 = vmatpush.msra.mxu0 0.0
    %1758 = vmatpush.msra.mxu0 0.0
    %1759 = vmatpush.msra.mxu0 0.0
    %1760 = vmatpush.msra.mxu0 0.0
    %1761 = vmatpush.msra.mxu0 0.0
    %1762 = vmatpush.msra.mxu0 0.0
    %1763 = vmatpush.msra.mxu0 %v1747
    %1764 = vmatmul.f32.gmra.mxu0 %v1705
    %v1765 = vpop.f32.mrf.mxu0
    %v1766 = vadd.f32 0.0, %v1765
    %1767 = vdwg.mxu0
    %1768 = vmatpush.msra.mxu0 0.0
    %1769 = vmatpush.msra.mxu0 0.0
    %1770 = vmatpush.msra.mxu0 0.0
    %1771 = vmatpush.msra.mxu0 0.0
    %1772 = vmatpush.msra.mxu0 0.0
    %1773 = vmatpush.msra.mxu0 0.0
    %1774 = vmatpush.msra.mxu0 0.0
    %1775 = vmatpush.msra.mxu0 0.0
    %1776 = vmatpush.msra.mxu0 0.0
    %1777 = vmatpush.msra.mxu0 0.0
    %1778 = vmatpush.msra.mxu0 0.0
    %1779 = vmatpush.msra.mxu0 0.0
    %1780 = vmatpush.msra.mxu0 0.0
    %1781 = vmatpush.msra.mxu0 0.0
    %1782 = vmatpush.msra.mxu0 0.0
    %1783 = vmatpush.msra.mxu0 %v1630
    %1784 = vmatmul.f32.gmra.mxu0 %v1705
    %v1785 = vpop.f32.mrf.mxu0
    %v1786 = vadd.f32 %v1766, %v1785
    %1787 = vdwg.mxu0
    %v1788 = vmul.f32 %v1745, 0.0625
    %v1789 = vmul.f32 %v1786, 0.0625
    %v1790 = vmul.f32 %v1788, %v1788
    %v1791 = vsub.f32 %v1789, %v1790
    %v1792 = vmax.f32 %v1791, 0.0
    %v1793 = vld [vmem:[%s2 + $0x6] sm:$0x3]
    %v1794 = vadd.f32 %v1792, 1e-05
    %v1795 = vrsqrt.pop %v1794
    %v1796 = vmul.f32 %v1795, %v1794
    %v1797 = vmul.f32 %v1796, %v1795
    %v1798 = vmul.f32 0.5, %v1797
    %v1799 = vsub.f32 1.5, %v1798
    %v1800 = vmul.f32 %v1795, %v1799
    %vm1801 = vweird.f32 %v1794
    %vm1802 = vweird.f32 %v1795
    %vm1803 = vmor %vm1801, %vm1802
    %v1804 = vsel %vm1803, %v1795, %v1800
    %v1805 = vmul.f32 %v1793, %v1804
    %v1806 = vmul.f32 %v1788, %v1805
    %v1808 = vrot.slane %v1806, 7
    %v1810 = vsub.f32 %v1793, %v1808
    %v1811 = vperm.slane %v1805, 0
    %v1812 = vmul.f32 %v1629, %v1811
    %v1813 = vperm.slane %v1810, 1
    %v1814 = vadd.f32 %v1812, %v1813
    %v1815 = vmax.f32 %v1814, 0.0
    %1816 = vst.msk [vmem:[#allocation3] sm:$0xff] %vm15, %v1815
    %v1817 = vld [vmem:[#allocation3] ss:$2 sm:$0xf]
    %v1818 = vld [vmem:[%s681] ss:$2 sm:$0xf]
    %v1819 = vmax.f32 %v1817, %v1818
    %vm1820 = vcmask 257024
    %1821 = vst.msk [vmem:[#allocation4] sm:$0xf] %vm1820, %v1819
    %v1822 = vmul.f32 %v1703, %v1811
    %v1823 = vadd.f32 %v1822, %v1813
    %v1824 = vmax.f32 %v1823, 0.0
    %1825 = vst.msk [vmem:[#allocation3] sm:$0xff] %vm15, %v1824
    %v1826 = vld [vmem:[#allocation3] ss:$2 sm:$0xf]
    %v1827 = vld [vmem:[%s681] ss:$2 sm:$0xf]
    %v1828 = vmax.f32 %v1826, %v1827
    %1829 = vst.msk [vmem:[#allocation4 + $0x4] sm:$0xf] %vm1820, %v1828
    // Predicated region
    $region14: #{tpu_custom_call.1} parent=1 // pred_check
      _
    $region15: #{tpu_custom_call.1} parent=1 // pred_check_branch
      %1831 = sbr.rel (0) target = $region17
    $region16: #{tpu_custom_call.1} parent=1 // pred_region
      %1833 = vsyncadd [#allocation5], 0
      %s1835 = sshll.u32 [#allocation4], 4
      %s1836 = int_to_ptr.vmem [resolvable:$true] %s1835
      %s1837 = sshll.u32 %s3, 4
      %s1838 = int_to_ptr.hbm [resolvable:$true] %s1837
      %1840 = dma.vmem_to_hbm [thread:$0]  %s1836, 128, %s1838, [#allocation5]
    $region17: #{tpu_custom_call.1} parent=1 // pred_fallthru
      _
    // Predicated region
    $region18: #{tpu_custom_call.1} parent=1 // pred_check
      _
    $region19: #{tpu_custom_call.1} parent=1 // pred_check_branch
      %1842 = sbr.rel (0) target = $region21
    $region20: #{tpu_custom_call.1} parent=1 // pred_region
      %1844 = dma.done [#allocation5], 128
    $region21: #{tpu_custom_call.1} parent=1 // pred_fallthru
      _
    %1845 = vsyncpa [#allocation5], 1

</llo_original>
